<compile_context>
chip_gen: v6e
topology: v6e:2x2x1
jax: 0.10.0
libtpu: 0.0.40
codegen_flags: <defaults>
</compile_context>

<pallas_src>
import functools

import numpy as np
import jax
import jax.numpy as jnp
from jax.experimental import pallas as pl
from jax.experimental.pallas import tpu as pltpu


# ----------------------------------------------------------------------------
# linspace / basis helpers (mirror model/MTSDNet.py)
# ----------------------------------------------------------------------------
def linspace_np(backcast_length, forecast_length, centered=False):
    if centered:
        norm = max(backcast_length, forecast_length)
        start = -backcast_length
        stop = forecast_length - 1
    else:
        norm = backcast_length + forecast_length
        start = 0
        stop = backcast_length + forecast_length - 1
    lin_space = np.linspace(start / norm, stop / norm,
                            backcast_length + forecast_length, dtype=np.float32)
    return lin_space[:backcast_length], lin_space[backcast_length:]


def make_bases(length, dim):
    b_ls, _ = linspace_np(length, 0, centered=False)
    norm = np.sqrt(1.0 / dim)
    trend = (np.stack([b_ls ** i for i in range(dim)]) * norm).astype(np.float32)
    p1, p2 = (dim // 2, dim // 2) if dim % 2 == 0 else (dim // 2, dim // 2 + 1)
    s1 = np.stack([np.cos(2 * np.pi * i * b_ls) for i in np.linspace(0, length, p1)])
    s2 = np.stack([np.sin(2 * np.pi * i * b_ls) for i in np.linspace(0, length, p2)])
    seasonal = np.concatenate([s1, s2]).astype(np.float32)
    return trend, seasonal


# ----------------------------------------------------------------------------
# Fused Pallas kernel (block + classify head)
# ----------------------------------------------------------------------------
def _fused_kernel(x_ref, w1, b1, w2, b2, w3, b3, w4, b4, wd, *args, use_basis):
    if use_basis:
        (basis, wc1d, wc1s, bc1, wc2, bc2, wc3, bc3, slab_ref, pred_ref) = args
    else:
        (wg1, bg1, wg2, bg2,
         wc1d, wc1s, bc1, wc2, bc2, wc3, bc3, slab_ref, pred_ref) = args

    M, L = x_ref.shape
    C = wc1d.shape[0]
    B = M // C
    hidden = bc1.shape[1]

    x = x_ref[...]                                   # (M, L), rows (channel, batch)

    # --- one-pass row statistics (sum / sum(x*x) / min / max over lanes) -----
    inv_len = 1.0 / L
    mean = jnp.sum(x, axis=1, keepdims=True) * inv_len
    var = jnp.maximum(jnp.sum(x * x, axis=1, keepdims=True) * inv_len - mean * mean, 0.0)
    std = jnp.sqrt(var) + 1e-5
    mn = jnp.min(x, axis=1, keepdims=True)
    mx = jnp.max(x, axis=1, keepdims=True)
    # EUP approximate reciprocal + one Newton step (keeps f32 accuracy).
    inv_std = pl.reciprocal(std, approx=True)
    inv_std = inv_std * (2.0 - std * inv_std)
    xn = (x - mean) * inv_std

    # --- basic_fc: 4 x (Conv1x1 + folded BN + ReLU); dim_fc: Conv1x1 + tanh --
    h = jnp.maximum(jnp.dot(xn, w1[...], preferred_element_type=jnp.float32) + b1[...], 0.0)
    h = jnp.maximum(jnp.dot(h, w2[...], preferred_element_type=jnp.float32) + b2[...], 0.0)
    h = jnp.maximum(jnp.dot(h, w3[...], preferred_element_type=jnp.float32) + b3[...], 0.0)
    h = jnp.maximum(jnp.dot(h, w4[...], preferred_element_type=jnp.float32) + b4[...], 0.0)
    d = jnp.tanh(jnp.dot(h, wd[...], preferred_element_type=jnp.float32))

    # --- backcast: fixed basis (trend/seasonal) or generic_fc ----------------
    if use_basis:
        back = jnp.dot(d, basis[...], preferred_element_type=jnp.float32)
    else:
        g = jnp.maximum(jnp.dot(d, wg1[...], preferred_element_type=jnp.float32) + bg1[...], 0.0)
        back = jnp.dot(g, wg2[...], preferred_element_type=jnp.float32) + bg2[...]
    back = back * std + mean                         # denorm

    # --- packed output slab: [back | min | max] (single lane-contiguous ref) -
    slab_ref[:, 0:L] = back
    slab_ref[:, L:L + 1] = mn
    slab_ref[:, L + 1:L + 2] = mx

    # --- classify_fc, fused: per-channel static slices, weights pre-permuted -
    acc = jnp.zeros((B, hidden), jnp.float32)
    for c in range(C):                               # small static unroll
        r = c * B
        acc = acc + jnp.dot(d[r:r + B, :], wc1d[c],
                            preferred_element_type=jnp.float32)
        ws = wc1s[c]                                 # (4, hidden): mean/std/min/max rows
        acc = acc + mean[r:r + B, :] * ws[0:1, :]
        acc = acc + std[r:r + B, :] * ws[1:2, :]
        acc = acc + mn[r:r + B, :] * ws[2:3, :]
        acc = acc + mx[r:r + B, :] * ws[3:4, :]
    h1 = jnp.maximum(acc + bc1[...], 0.0)
    h2 = jnp.maximum(jnp.dot(h1, wc2[...], preferred_element_type=jnp.float32) + bc2[...], 0.0)
    pred_ref[...] = jnp.dot(h2, wc3[...], preferred_element_type=jnp.float32) + bc3[...]


# ----------------------------------------------------------------------------
# pallas_call plumbing (shapes are small -> whole arrays as single blocks)
# ----------------------------------------------------------------------------
def _spec(shape):
    nd = len(shape)
    return pl.BlockSpec(shape, lambda i, nd=nd: (0,) * nd)


def _call(kernel, inputs, out_shapes):
    out_shape = tuple(jax.ShapeDtypeStruct(s, jnp.float32) for s in out_shapes)
    return pl.pallas_call(
        kernel,
        grid=(1,),
        in_specs=[_spec(tuple(a.shape)) for a in inputs],
        out_specs=tuple(_spec(s) for s in out_shapes),
        out_shape=out_shape,
        compiler_params=pltpu.CompilerParams(dimension_semantics=("arbitrary",)),
    )(*inputs)


# ----------------------------------------------------------------------------
# Parameter initialization (deterministic, BN folded in inference mode)
# ----------------------------------------------------------------------------
def _fold_bn(w, gamma, beta, rmean, rvar, bias=None, eps=1e-5):
    """w: (out, in). Returns (in, out) weight and (1, out) bias with BN folded."""
    scale = gamma / np.sqrt(rvar + eps)
    w_f = (w * scale[:, None]).astype(np.float32)
    b = beta - rmean * scale
    if bias is not None:
        b = b + bias * scale
    return w_f.T.copy(), b[None, :].astype(np.float32)


def init_params(seed, length, hidden, dim, in_channel, out_channel):
    rng = np.random.default_rng(seed)

    def w(out_c, in_c):
        return (rng.standard_normal((out_c, in_c)) * np.sqrt(1.0 / in_c)).astype(np.float32)

    def bias(n):
        return (0.05 * rng.standard_normal(n)).astype(np.float32)

    def bn(n):
        gamma = (1.0 + 0.1 * rng.standard_normal(n)).astype(np.float32)
        beta = (0.05 * rng.standard_normal(n)).astype(np.float32)
        rmean = (0.01 * rng.standard_normal(n)).astype(np.float32)
        rvar = (1.0 + 0.1 * np.abs(rng.standard_normal(n))).astype(np.float32)
        return gamma, beta, rmean, rvar

    p = {}
    # basic_fc : 4 x (Conv2d(no bias) + BN + ReLU)
    sizes = [(hidden, length), (hidden, hidden), (hidden, hidden), (hidden, hidden)]
    for i, (oc, ic) in enumerate(sizes, start=1):
        p[f"w{i}"], p[f"b{i}"] = _fold_bn(w(oc, ic), *bn(oc))
    # dim_fc : Conv2d(hidden -> dim, no bias) + Tanh
    p["wd"] = w(dim, hidden).T.copy()
    # generic_fc : Conv2d(dim->hidden, bias)+BN+ReLU, Conv2d(hidden->length, bias)
    p["wg1"], p["bg1"] = _fold_bn(w(hidden, dim), *bn(hidden), bias=bias(hidden))
    p["wg2"] = w(length, hidden).T.copy()
    p["bg2"] = bias(length)[None, :]
    # classify_fc : Linear+BN+ReLU, Linear+BN+ReLU, Linear
    feat = (dim + 4) * in_channel
    wc1, bc1 = _fold_bn(w(hidden, feat), *bn(hidden), bias=bias(hidden))  # (feat,hidden),(1,hidden)
    p["wc1"], p["bc1"] = wc1, bc1
    p["wc2"], p["bc2"] = _fold_bn(w(hidden, hidden), *bn(hidden), bias=bias(hidden))
    p["wc3"] = w(out_channel, hidden).T.copy()
    p["bc3"] = bias(out_channel)[None, :]
    # Channel-major re-layout of the first classify weight so the fused kernel
    # consumes d / stats in their native (channel, batch)-row layout without
    # any in-kernel transpose.  Torch feature order: d(k,c) -> k*C+c, then
    # mean(c), std(c), min(c), max(c).
    C = in_channel
    wc1d = np.empty((C, dim, hidden), np.float32)
    wc1s = np.empty((C, 4, hidden), np.float32)
    for c in range(C):
        for k in range(dim):
            wc1d[c, k] = wc1[k * C + c]
        wc1s[c, 0] = wc1[dim * C + c]            # mean
        wc1s[c, 1] = wc1[dim * C + C + c]        # std
        wc1s[c, 2] = wc1[dim * C + 2 * C + c]    # min
        wc1s[c, 3] = wc1[dim * C + 3 * C + c]    # max
    p["wc1d"], p["wc1s"] = wc1d, wc1s
    # fixed bases
    trend, seasonal = make_bases(length, dim)
    p["trend"] = trend
    p["seasonal"] = seasonal
    return {k: jnp.asarray(v) for k, v in p.items()}


# ----------------------------------------------------------------------------
# Forward wrapper (only layout plumbing outside the kernel)
# ----------------------------------------------------------------------------
def base_block_forward(x, p, block_type):
    B, C, L = x.shape
    # (channel, batch) row order so the kernel can slice per channel statically
    x_rows = jnp.transpose(x, (1, 0, 2)).reshape(C * B, L)

    common = [p["w1"], p["b1"], p["w2"], p["b2"], p["w3"], p["b3"],
              p["w4"], p["b4"], p["wd"]]
    classify = [p["wc1d"], p["wc1s"], p["bc1"], p["wc2"], p["bc2"],
                p["wc3"], p["bc3"]]
    out_channel = p["wc3"].shape[1]
    out_shapes = [(C * B, L + 2), (B, out_channel)]

    if block_type in ("trend", "seasonal"):
        basis = p["trend"] if block_type == "trend" else p["seasonal"]
        kernel = functools.partial(_fused_kernel, use_basis=True)
        inputs = [x_rows] + common + [basis] + classify
    elif block_type == "generic":
        kernel = functools.partial(_fused_kernel, use_basis=False)
        inputs = [x_rows] + common + [p["wg1"], p["bg1"], p["wg2"], p["bg2"]] + classify
    else:
        raise ValueError(block_type)

    slab, predict = _call(kernel, inputs, out_shapes)

    slab = jnp.transpose(slab.reshape(C, B, L + 2), (1, 0, 2))   # (B, C, L+2)
    back = slab[:, :, :L]
    minv = slab[:, :, L:L + 1]
    maxv = slab[:, :, L + 1:L + 2]
    return back, predict, maxv, minv


# ----------------------------------------------------------------------------
# Pure-JAX reference (same folded params) for a correctness check
# ----------------------------------------------------------------------------
def reference_forward(x, p, block_type):
    B, C, L = x.shape
    mean = jnp.mean(x, axis=2, keepdims=True)
    std = jnp.sqrt(jnp.mean((x - mean) ** 2, axis=2, keepdims=True)) + 1e-5
    mx = jnp.max(x, axis=2, keepdims=True)
    mn = jnp.min(x, axis=2, keepdims=True)
    xn = (x - mean) / std
    h = jax.nn.relu(jnp.einsum("bcl,lh->bch", xn, p["w1"]) + p["b1"][0])
    h = jax.nn.relu(h @ p["w2"] + p["b2"][0])
    h = jax.nn.relu(h @ p["w3"] + p["b3"][0])
    h = jax.nn.relu(h @ p["w4"] + p["b4"][0])
    d = jnp.tanh(h @ p["wd"])
    if block_type == "trend":
        back = d @ p["trend"]
    elif block_type == "seasonal":
        back = d @ p["seasonal"]
    else:
        g = jax.nn.relu(d @ p["wg1"] + p["bg1"][0])
        back = g @ p["wg2"] + p["bg2"][0]
    back = back * std + mean
    f_dim = jnp.transpose(d, (0, 2, 1)).reshape(B, -1)
    feats = jnp.concatenate([f_dim, mean[..., 0], std[..., 0], mn[..., 0], mx[..., 0]], 1)
    hh = jax.nn.relu(feats @ p["wc1"] + p["bc1"][0])
    hh = jax.nn.relu(hh @ p["wc2"] + p["bc2"][0])
    pred = hh @ p["wc3"] + p["bc3"][0]
    return back, pred, mx, mn


# ----------------------------------------------------------------------------
if __name__ == "__main__":
    B, in_channel, length = 2, 4, 8
    hidden, dim, out_channel = 32, 6, 3

    params = init_params(0, length, hidden, dim, in_channel, out_channel)
    x = jax.random.normal(jax.random.PRNGKey(0), (B, in_channel, length), jnp.float32)

    fwd = jax.jit(base_block_forward, static_argnames=("block_type",))

    for block_type in ("trend", "seasonal", "generic"):
        back, predict, maxv, minv = fwd(x, params, block_type=block_type)
        jax.block_until_ready((back, predict, maxv, minv))
        r_back, r_pred, r_max, r_min = reference_forward(x, params, block_type)
        # approx reciprocal (+ Newton step) in the kernel -> slightly relaxed tol
        np.testing.assert_allclose(np.asarray(back), np.asarray(r_back), rtol=5e-4, atol=5e-4)
        np.testing.assert_allclose(np.asarray(predict), np.asarray(r_pred), rtol=5e-4, atol=5e-4)
        np.testing.assert_allclose(np.asarray(maxv), np.asarray(r_max), rtol=1e-5, atol=1e-5)
        np.testing.assert_allclose(np.asarray(minv), np.asarray(r_min), rtol=1e-5, atol=1e-5)

    print("KERNEL_OK")
</pallas_src>

<mosaic_0001>
module attributes {stable_mosaic.version = 11 : i64} {
  func.func @_fused_kernel(%arg0: i32, %arg1: memref<8x8xf32, #tpu.memory_space<vmem>>, %arg2: memref<8x32xf32, #tpu.memory_space<vmem>>, %arg3: memref<1x32xf32, #tpu.memory_space<vmem>>, %arg4: memref<32x32xf32, #tpu.memory_space<vmem>>, %arg5: memref<1x32xf32, #tpu.memory_space<vmem>>, %arg6: memref<32x32xf32, #tpu.memory_space<vmem>>, %arg7: memref<1x32xf32, #tpu.memory_space<vmem>>, %arg8: memref<32x32xf32, #tpu.memory_space<vmem>>, %arg9: memref<1x32xf32, #tpu.memory_space<vmem>>, %arg10: memref<32x6xf32, #tpu.memory_space<vmem>>, %arg11: memref<6x8xf32, #tpu.memory_space<vmem>>, %arg12: memref<4x6x32xf32, #tpu.memory_space<vmem>>, %arg13: memref<4x4x32xf32, #tpu.memory_space<vmem>>, %arg14: memref<1x32xf32, #tpu.memory_space<vmem>>, %arg15: memref<32x32xf32, #tpu.memory_space<vmem>>, %arg16: memref<1x32xf32, #tpu.memory_space<vmem>>, %arg17: memref<32x3xf32, #tpu.memory_space<vmem>>, %arg18: memref<1x3xf32, #tpu.memory_space<vmem>>, %arg19: memref<8x10xf32, #tpu.memory_space<vmem>>, %arg20: memref<2x3xf32, #tpu.memory_space<vmem>>) attributes {dimension_semantics = [#tpu.dimension_semantics<arbitrary>], iteration_bounds = array<i64: 1>, scalar_prefetch = 0 : i64, scratch_operands = 0 : i64, tpu.core_type = #tpu.core_type<tc>, window_params = [{pipeline_mode = #tpu.pipeline_mode<synchronous>, transform_indices = @transform_0, window_bounds = array<i64: 8, 8>}, {pipeline_mode = #tpu.pipeline_mode<synchronous>, transform_indices = @transform_1, window_bounds = array<i64: 8, 32>}, {pipeline_mode = #tpu.pipeline_mode<synchronous>, transform_indices = @transform_2, window_bounds = array<i64: 1, 32>}, {pipeline_mode = #tpu.pipeline_mode<synchronous>, transform_indices = @transform_3, window_bounds = array<i64: 32, 32>}, {pipeline_mode = #tpu.pipeline_mode<synchronous>, transform_indices = @transform_4, window_bounds = array<i64: 1, 32>}, {pipeline_mode = #tpu.pipeline_mode<synchronous>, transform_indices = @transform_5, window_bounds = array<i64: 32, 32>}, {pipeline_mode = #tpu.pipeline_mode<synchronous>, transform_indices = @transform_6, window_bounds = array<i64: 1, 32>}, {pipeline_mode = #tpu.pipeline_mode<synchronous>, transform_indices = @transform_7, window_bounds = array<i64: 32, 32>}, {pipeline_mode = #tpu.pipeline_mode<synchronous>, transform_indices = @transform_8, window_bounds = array<i64: 1, 32>}, {pipeline_mode = #tpu.pipeline_mode<synchronous>, transform_indices = @transform_9, window_bounds = array<i64: 32, 6>}, {pipeline_mode = #tpu.pipeline_mode<synchronous>, transform_indices = @transform_10, window_bounds = array<i64: 6, 8>}, {pipeline_mode = #tpu.pipeline_mode<synchronous>, transform_indices = @transform_11, window_bounds = array<i64: 4, 6, 32>}, {pipeline_mode = #tpu.pipeline_mode<synchronous>, transform_indices = @transform_12, window_bounds = array<i64: 4, 4, 32>}, {pipeline_mode = #tpu.pipeline_mode<synchronous>, transform_indices = @transform_13, window_bounds = array<i64: 1, 32>}, {pipeline_mode = #tpu.pipeline_mode<synchronous>, transform_indices = @transform_14, window_bounds = array<i64: 32, 32>}, {pipeline_mode = #tpu.pipeline_mode<synchronous>, transform_indices = @transform_15, window_bounds = array<i64: 1, 32>}, {pipeline_mode = #tpu.pipeline_mode<synchronous>, transform_indices = @transform_16, window_bounds = array<i64: 32, 3>}, {pipeline_mode = #tpu.pipeline_mode<synchronous>, transform_indices = @transform_17, window_bounds = array<i64: 1, 3>}, {pipeline_mode = #tpu.pipeline_mode<synchronous>, transform_indices = @transform_18, window_bounds = array<i64: 8, 10>}, {pipeline_mode = #tpu.pipeline_mode<synchronous>, transform_indices = @transform_19, window_bounds = array<i64: 2, 3>}]} {
    %c0 = arith.constant 0 : index
    %c0_0 = arith.constant 0 : index
    %0 = vector.load %arg1[%c0, %c0_0] : memref<8x8xf32, #tpu.memory_space<vmem>>, vector<8x8xf32>
    %cst = arith.constant dense<0.000000e+00> : vector<8xf32>
    %1 = vector.multi_reduction <add>, %0, %cst [1] : vector<8x8xf32> to vector<8xf32>
    %2 = vector.shape_cast %1 : vector<8xf32> to vector<8x1xf32>
    %cst_1 = arith.constant 1.250000e-01 : f32
    %3 = vector.broadcast %cst_1 : f32 to vector<8x1xf32>
    %4 = arith.mulf %2, %3 : vector<8x1xf32>
    %5 = arith.mulf %0, %0 : vector<8x8xf32>
    %cst_2 = arith.constant dense<0.000000e+00> : vector<8xf32>
    %6 = vector.multi_reduction <add>, %5, %cst_2 [1] : vector<8x8xf32> to vector<8xf32>
    %7 = vector.shape_cast %6 : vector<8xf32> to vector<8x1xf32>
    %cst_3 = arith.constant 1.250000e-01 : f32
    %8 = vector.broadcast %cst_3 : f32 to vector<8x1xf32>
    %9 = arith.mulf %7, %8 : vector<8x1xf32>
    %10 = arith.mulf %4, %4 : vector<8x1xf32>
    %11 = arith.subf %9, %10 : vector<8x1xf32>
    %cst_4 = arith.constant 0.000000e+00 : f32
    %12 = vector.broadcast %cst_4 : f32 to vector<8x1xf32>
    %13 = arith.maximumf %11, %12 : vector<8x1xf32>
    %14 = math.sqrt %13 : vector<8x1xf32>
    %cst_5 = arith.constant 9.99999974E-6 : f32
    %15 = vector.broadcast %cst_5 : f32 to vector<8x1xf32>
    %16 = arith.addf %14, %15 : vector<8x1xf32>
    %cst_6 = arith.constant dense<0x7F800000> : vector<8xf32>
    %17 = vector.multi_reduction <minimumf>, %0, %cst_6 [1] : vector<8x8xf32> to vector<8xf32>
    %18 = vector.shape_cast %17 : vector<8xf32> to vector<8x1xf32>
    %cst_7 = arith.constant dense<0xFF800000> : vector<8xf32>
    %19 = vector.multi_reduction <maximumf>, %0, %cst_7 [1] : vector<8x8xf32> to vector<8xf32>
    %20 = vector.shape_cast %19 : vector<8xf32> to vector<8x1xf32>
    %21 = tpu.reciprocal %16 {approx = true} : vector<8x1xf32> -> vector<8x1xf32>
    %22 = arith.mulf %16, %21 : vector<8x1xf32>
    %cst_8 = arith.constant 2.000000e+00 : f32
    %23 = vector.broadcast %cst_8 : f32 to vector<8x1xf32>
    %24 = arith.subf %23, %22 : vector<8x1xf32>
    %25 = arith.mulf %21, %24 : vector<8x1xf32>
    %26 = vector.broadcast %4 : vector<8x1xf32> to vector<8x8xf32>
    %27 = arith.subf %0, %26 : vector<8x8xf32>
    %28 = vector.broadcast %25 : vector<8x1xf32> to vector<8x8xf32>
    %29 = arith.mulf %27, %28 : vector<8x8xf32>
    %c0_9 = arith.constant 0 : index
    %c0_10 = arith.constant 0 : index
    %30 = vector.load %arg2[%c0_9, %c0_10] : memref<8x32xf32, #tpu.memory_space<vmem>>, vector<8x32xf32>
    %cst_11 = arith.constant dense<0.000000e+00> : vector<8x32xf32>
    %31 = tpu.matmul %29, %30, %cst_11 {dimension_numbers = #tpu.dot_dimension_numbers<[1], [0], [0], [1], [0, 0, 1, 1], [], []>} : vector<8x8xf32>, vector<8x32xf32>, vector<8x32xf32> -> vector<8x32xf32>
    %c0_12 = arith.constant 0 : index
    %c0_13 = arith.constant 0 : index
    %32 = vector.load %arg3[%c0_12, %c0_13] : memref<1x32xf32, #tpu.memory_space<vmem>>, vector<1x32xf32>
    %33 = vector.broadcast %32 : vector<1x32xf32> to vector<8x32xf32>
    %34 = arith.addf %31, %33 : vector<8x32xf32>
    %cst_14 = arith.constant 0.000000e+00 : f32
    %35 = vector.broadcast %cst_14 : f32 to vector<8x32xf32>
    %36 = arith.maximumf %34, %35 : vector<8x32xf32>
    %c0_15 = arith.constant 0 : index
    %c0_16 = arith.constant 0 : index
    %37 = vector.load %arg4[%c0_15, %c0_16] : memref<32x32xf32, #tpu.memory_space<vmem>>, vector<32x32xf32>
    %cst_17 = arith.constant dense<0.000000e+00> : vector<8x32xf32>
    %38 = tpu.matmul %36, %37, %cst_17 {dimension_numbers = #tpu.dot_dimension_numbers<[1], [0], [0], [1], [0, 0, 1, 1], [], []>} : vector<8x32xf32>, vector<32x32xf32>, vector<8x32xf32> -> vector<8x32xf32>
    %c0_18 = arith.constant 0 : index
    %c0_19 = arith.constant 0 : index
    %39 = vector.load %arg5[%c0_18, %c0_19] : memref<1x32xf32, #tpu.memory_space<vmem>>, vector<1x32xf32>
    %40 = vector.broadcast %39 : vector<1x32xf32> to vector<8x32xf32>
    %41 = arith.addf %38, %40 : vector<8x32xf32>
    %cst_20 = arith.constant 0.000000e+00 : f32
    %42 = vector.broadcast %cst_20 : f32 to vector<8x32xf32>
    %43 = arith.maximumf %41, %42 : vector<8x32xf32>
    %c0_21 = arith.constant 0 : index
    %c0_22 = arith.constant 0 : index
    %44 = vector.load %arg6[%c0_21, %c0_22] : memref<32x32xf32, #tpu.memory_space<vmem>>, vector<32x32xf32>
    %cst_23 = arith.constant dense<0.000000e+00> : vector<8x32xf32>
    %45 = tpu.matmul %43, %44, %cst_23 {dimension_numbers = #tpu.dot_dimension_numbers<[1], [0], [0], [1], [0, 0, 1, 1], [], []>} : vector<8x32xf32>, vector<32x32xf32>, vector<8x32xf32> -> vector<8x32xf32>
    %c0_24 = arith.constant 0 : index
    %c0_25 = arith.constant 0 : index
    %46 = vector.load %arg7[%c0_24, %c0_25] : memref<1x32xf32, #tpu.memory_space<vmem>>, vector<1x32xf32>
    %47 = vector.broadcast %46 : vector<1x32xf32> to vector<8x32xf32>
    %48 = arith.addf %45, %47 : vector<8x32xf32>
    %cst_26 = arith.constant 0.000000e+00 : f32
    %49 = vector.broadcast %cst_26 : f32 to vector<8x32xf32>
    %50 = arith.maximumf %48, %49 : vector<8x32xf32>
    %c0_27 = arith.constant 0 : index
    %c0_28 = arith.constant 0 : index
    %51 = vector.load %arg8[%c0_27, %c0_28] : memref<32x32xf32, #tpu.memory_space<vmem>>, vector<32x32xf32>
    %cst_29 = arith.constant dense<0.000000e+00> : vector<8x32xf32>
    %52 = tpu.matmul %50, %51, %cst_29 {dimension_numbers = #tpu.dot_dimension_numbers<[1], [0], [0], [1], [0, 0, 1, 1], [], []>} : vector<8x32xf32>, vector<32x32xf32>, vector<8x32xf32> -> vector<8x32xf32>
    %c0_30 = arith.constant 0 : index
    %c0_31 = arith.constant 0 : index
    %53 = vector.load %arg9[%c0_30, %c0_31] : memref<1x32xf32, #tpu.memory_space<vmem>>, vector<1x32xf32>
    %54 = vector.broadcast %53 : vector<1x32xf32> to vector<8x32xf32>
    %55 = arith.addf %52, %54 : vector<8x32xf32>
    %cst_32 = arith.constant 0.000000e+00 : f32
    %56 = vector.broadcast %cst_32 : f32 to vector<8x32xf32>
    %57 = arith.maximumf %55, %56 : vector<8x32xf32>
    %c0_33 = arith.constant 0 : index
    %c0_34 = arith.constant 0 : index
    %58 = vector.load %arg10[%c0_33, %c0_34] : memref<32x6xf32, #tpu.memory_space<vmem>>, vector<32x6xf32>
    %cst_35 = arith.constant dense<0.000000e+00> : vector<8x6xf32>
    %59 = tpu.matmul %57, %58, %cst_35 {dimension_numbers = #tpu.dot_dimension_numbers<[1], [0], [0], [1], [0, 0, 1, 1], [], []>} : vector<8x32xf32>, vector<32x6xf32>, vector<8x6xf32> -> vector<8x6xf32>
    %60 = math.tanh %59 : vector<8x6xf32>
    %c0_36 = arith.constant 0 : index
    %c0_37 = arith.constant 0 : index
    %61 = vector.load %arg11[%c0_36, %c0_37] : memref<6x8xf32, #tpu.memory_space<vmem>>, vector<6x8xf32>
    %cst_38 = arith.constant dense<0.000000e+00> : vector<8x8xf32>
    %62 = tpu.matmul %60, %61, %cst_38 {dimension_numbers = #tpu.dot_dimension_numbers<[1], [0], [0], [1], [0, 0, 1, 1], [], []>} : vector<8x6xf32>, vector<6x8xf32>, vector<8x8xf32> -> vector<8x8xf32>
    %63 = vector.broadcast %16 : vector<8x1xf32> to vector<8x8xf32>
    %64 = arith.mulf %62, %63 : vector<8x8xf32>
    %65 = vector.broadcast %4 : vector<8x1xf32> to vector<8x8xf32>
    %66 = arith.addf %64, %65 : vector<8x8xf32>
    %c0_39 = arith.constant 0 : index
    %c0_40 = arith.constant 0 : index
    %67 = vector.load %arg19[%c0_39, %c0_40] : memref<8x10xf32, #tpu.memory_space<vmem>>, vector<8x8xf32>
    tpu.vector_store %arg19[%c0_39, %c0_40], %66 {strides = array<i32>} : memref<8x10xf32, #tpu.memory_space<vmem>>, vector<8x8xf32>,
    %c0_41 = arith.constant 0 : index
    %c8 = arith.constant 8 : index
    %68 = vector.load %arg19[%c0_41, %c8] : memref<8x10xf32, #tpu.memory_space<vmem>>, vector<8x1xf32>
    tpu.vector_store %arg19[%c0_41, %c8], %18 {strides = array<i32>} : memref<8x10xf32, #tpu.memory_space<vmem>>, vector<8x1xf32>,
    %c0_42 = arith.constant 0 : index
    %c9 = arith.constant 9 : index
    %69 = vector.load %arg19[%c0_42, %c9] : memref<8x10xf32, #tpu.memory_space<vmem>>, vector<8x1xf32>
    tpu.vector_store %arg19[%c0_42, %c9], %20 {strides = array<i32>} : memref<8x10xf32, #tpu.memory_space<vmem>>, vector<8x1xf32>,
    %cst_43 = arith.constant 0.000000e+00 : f32
    %70 = vector.broadcast %cst_43 : f32 to vector<2x32xf32>
    %71 = vector.extract_strided_slice %60 {offsets = [0, 0], sizes = [2, 6], strides = [1, 1]} : vector<8x6xf32> to vector<2x6xf32>
    %c0_44 = arith.constant 0 : index
    %c0_45 = arith.constant 0 : index
    %c0_46 = arith.constant 0 : index
    %72 = vector.load %arg12[%c0_44, %c0_45, %c0_46] : memref<4x6x32xf32, #tpu.memory_space<vmem>>, vector<1x6x32xf32>
    %73 = vector.shape_cast %72 : vector<1x6x32xf32> to vector<6x32xf32>
    %cst_47 = arith.constant dense<0.000000e+00> : vector<2x32xf32>
    %74 = tpu.matmul %71, %73, %cst_47 {dimension_numbers = #tpu.dot_dimension_numbers<[1], [0], [0], [1], [0, 0, 1, 1], [], []>} : vector<2x6xf32>, vector<6x32xf32>, vector<2x32xf32> -> vector<2x32xf32>
    %75 = arith.addf %70, %74 : vector<2x32xf32>
    %c0_48 = arith.constant 0 : index
    %c0_49 = arith.constant 0 : index
    %c0_50 = arith.constant 0 : index
    %76 = vector.load %arg13[%c0_48, %c0_49, %c0_50] : memref<4x4x32xf32, #tpu.memory_space<vmem>>, vector<1x4x32xf32>
    %77 = vector.shape_cast %76 : vector<1x4x32xf32> to vector<4x32xf32>
    %78 = vector.extract_strided_slice %4 {offsets = [0, 0], sizes = [2, 1], strides = [1, 1]} : vector<8x1xf32> to vector<2x1xf32>
    %79 = vector.extract_strided_slice %77 {offsets = [0, 0], sizes = [1, 32], strides = [1, 1]} : vector<4x32xf32> to vector<1x32xf32>
    %80 = vector.broadcast %78 : vector<2x1xf32> to vector<2x32xf32>
    %81 = vector.broadcast %79 : vector<1x32xf32> to vector<2x32xf32>
    %82 = arith.mulf %80, %81 : vector<2x32xf32>
    %83 = arith.addf %75, %82 : vector<2x32xf32>
    %84 = vector.extract_strided_slice %16 {offsets = [0, 0], sizes = [2, 1], strides = [1, 1]} : vector<8x1xf32> to vector<2x1xf32>
    %85 = vector.extract_strided_slice %77 {offsets = [1, 0], sizes = [1, 32], strides = [1, 1]} : vector<4x32xf32> to vector<1x32xf32>
    %86 = vector.broadcast %84 : vector<2x1xf32> to vector<2x32xf32>
    %87 = vector.broadcast %85 : vector<1x32xf32> to vector<2x32xf32>
    %88 = arith.mulf %86, %87 : vector<2x32xf32>
    %89 = arith.addf %83, %88 : vector<2x32xf32>
    %90 = vector.extract_strided_slice %18 {offsets = [0, 0], sizes = [2, 1], strides = [1, 1]} : vector<8x1xf32> to vector<2x1xf32>
    %91 = vector.extract_strided_slice %77 {offsets = [2, 0], sizes = [1, 32], strides = [1, 1]} : vector<4x32xf32> to vector<1x32xf32>
    %92 = vector.broadcast %90 : vector<2x1xf32> to vector<2x32xf32>
    %93 = vector.broadcast %91 : vector<1x32xf32> to vector<2x32xf32>
    %94 = arith.mulf %92, %93 : vector<2x32xf32>
    %95 = arith.addf %89, %94 : vector<2x32xf32>
    %96 = vector.extract_strided_slice %20 {offsets = [0, 0], sizes = [2, 1], strides = [1, 1]} : vector<8x1xf32> to vector<2x1xf32>
    %97 = vector.extract_strided_slice %77 {offsets = [3, 0], sizes = [1, 32], strides = [1, 1]} : vector<4x32xf32> to vector<1x32xf32>
    %98 = vector.broadcast %96 : vector<2x1xf32> to vector<2x32xf32>
    %99 = vector.broadcast %97 : vector<1x32xf32> to vector<2x32xf32>
    %100 = arith.mulf %98, %99 : vector<2x32xf32>
    %101 = arith.addf %95, %100 : vector<2x32xf32>
    %102 = vector.extract_strided_slice %60 {offsets = [2, 0], sizes = [2, 6], strides = [1, 1]} : vector<8x6xf32> to vector<2x6xf32>
    %c1 = arith.constant 1 : index
    %c0_51 = arith.constant 0 : index
    %c0_52 = arith.constant 0 : index
    %103 = vector.load %arg12[%c1, %c0_51, %c0_52] : memref<4x6x32xf32, #tpu.memory_space<vmem>>, vector<1x6x32xf32>
    %104 = vector.shape_cast %103 : vector<1x6x32xf32> to vector<6x32xf32>
    %cst_53 = arith.constant dense<0.000000e+00> : vector<2x32xf32>
    %105 = tpu.matmul %102, %104, %cst_53 {dimension_numbers = #tpu.dot_dimension_numbers<[1], [0], [0], [1], [0, 0, 1, 1], [], []>} : vector<2x6xf32>, vector<6x32xf32>, vector<2x32xf32> -> vector<2x32xf32>
    %106 = arith.addf %101, %105 : vector<2x32xf32>
    %c1_54 = arith.constant 1 : index
    %c0_55 = arith.constant 0 : index
    %c0_56 = arith.constant 0 : index
    %107 = vector.load %arg13[%c1_54, %c0_55, %c0_56] : memref<4x4x32xf32, #tpu.memory_space<vmem>>, vector<1x4x32xf32>
    %108 = vector.shape_cast %107 : vector<1x4x32xf32> to vector<4x32xf32>
    %109 = vector.extract_strided_slice %4 {offsets = [2, 0], sizes = [2, 1], strides = [1, 1]} : vector<8x1xf32> to vector<2x1xf32>
    %110 = vector.extract_strided_slice %108 {offsets = [0, 0], sizes = [1, 32], strides = [1, 1]} : vector<4x32xf32> to vector<1x32xf32>
    %111 = vector.broadcast %109 : vector<2x1xf32> to vector<2x32xf32>
    %112 = vector.broadcast %110 : vector<1x32xf32> to vector<2x32xf32>
    %113 = arith.mulf %111, %112 : vector<2x32xf32>
    %114 = arith.addf %106, %113 : vector<2x32xf32>
    %115 = vector.extract_strided_slice %16 {offsets = [2, 0], sizes = [2, 1], strides = [1, 1]} : vector<8x1xf32> to vector<2x1xf32>
    %116 = vector.extract_strided_slice %108 {offsets = [1, 0], sizes = [1, 32], strides = [1, 1]} : vector<4x32xf32> to vector<1x32xf32>
    %117 = vector.broadcast %115 : vector<2x1xf32> to vector<2x32xf32>
    %118 = vector.broadcast %116 : vector<1x32xf32> to vector<2x32xf32>
    %119 = arith.mulf %117, %118 : vector<2x32xf32>
    %120 = arith.addf %114, %119 : vector<2x32xf32>
    %121 = vector.extract_strided_slice %18 {offsets = [2, 0], sizes = [2, 1], strides = [1, 1]} : vector<8x1xf32> to vector<2x1xf32>
    %122 = vector.extract_strided_slice %108 {offsets = [2, 0], sizes = [1, 32], strides = [1, 1]} : vector<4x32xf32> to vector<1x32xf32>
    %123 = vector.broadcast %121 : vector<2x1xf32> to vector<2x32xf32>
    %124 = vector.broadcast %122 : vector<1x32xf32> to vector<2x32xf32>
    %125 = arith.mulf %123, %124 : vector<2x32xf32>
    %126 = arith.addf %120, %125 : vector<2x32xf32>
    %127 = vector.extract_strided_slice %20 {offsets = [2, 0], sizes = [2, 1], strides = [1, 1]} : vector<8x1xf32> to vector<2x1xf32>
    %128 = vector.extract_strided_slice %108 {offsets = [3, 0], sizes = [1, 32], strides = [1, 1]} : vector<4x32xf32> to vector<1x32xf32>
    %129 = vector.broadcast %127 : vector<2x1xf32> to vector<2x32xf32>
    %130 = vector.broadcast %128 : vector<1x32xf32> to vector<2x32xf32>
    %131 = arith.mulf %129, %130 : vector<2x32xf32>
    %132 = arith.addf %126, %131 : vector<2x32xf32>
    %133 = vector.extract_strided_slice %60 {offsets = [4, 0], sizes = [2, 6], strides = [1, 1]} : vector<8x6xf32> to vector<2x6xf32>
    %c2 = arith.constant 2 : index
    %c0_57 = arith.constant 0 : index
    %c0_58 = arith.constant 0 : index
    %134 = vector.load %arg12[%c2, %c0_57, %c0_58] : memref<4x6x32xf32, #tpu.memory_space<vmem>>, vector<1x6x32xf32>
    %135 = vector.shape_cast %134 : vector<1x6x32xf32> to vector<6x32xf32>
    %cst_59 = arith.constant dense<0.000000e+00> : vector<2x32xf32>
    %136 = tpu.matmul %133, %135, %cst_59 {dimension_numbers = #tpu.dot_dimension_numbers<[1], [0], [0], [1], [0, 0, 1, 1], [], []>} : vector<2x6xf32>, vector<6x32xf32>, vector<2x32xf32> -> vector<2x32xf32>
    %137 = arith.addf %132, %136 : vector<2x32xf32>
    %c2_60 = arith.constant 2 : index
    %c0_61 = arith.constant 0 : index
    %c0_62 = arith.constant 0 : index
    %138 = vector.load %arg13[%c2_60, %c0_61, %c0_62] : memref<4x4x32xf32, #tpu.memory_space<vmem>>, vector<1x4x32xf32>
    %139 = vector.shape_cast %138 : vector<1x4x32xf32> to vector<4x32xf32>
    %140 = vector.extract_strided_slice %4 {offsets = [4, 0], sizes = [2, 1], strides = [1, 1]} : vector<8x1xf32> to vector<2x1xf32>
    %141 = vector.extract_strided_slice %139 {offsets = [0, 0], sizes = [1, 32], strides = [1, 1]} : vector<4x32xf32> to vector<1x32xf32>
    %142 = vector.broadcast %140 : vector<2x1xf32> to vector<2x32xf32>
    %143 = vector.broadcast %141 : vector<1x32xf32> to vector<2x32xf32>
    %144 = arith.mulf %142, %143 : vector<2x32xf32>
    %145 = arith.addf %137, %144 : vector<2x32xf32>
    %146 = vector.extract_strided_slice %16 {offsets = [4, 0], sizes = [2, 1], strides = [1, 1]} : vector<8x1xf32> to vector<2x1xf32>
    %147 = vector.extract_strided_slice %139 {offsets = [1, 0], sizes = [1, 32], strides = [1, 1]} : vector<4x32xf32> to vector<1x32xf32>
    %148 = vector.broadcast %146 : vector<2x1xf32> to vector<2x32xf32>
    %149 = vector.broadcast %147 : vector<1x32xf32> to vector<2x32xf32>
    %150 = arith.mulf %148, %149 : vector<2x32xf32>
    %151 = arith.addf %145, %150 : vector<2x32xf32>
    %152 = vector.extract_strided_slice %18 {offsets = [4, 0], sizes = [2, 1], strides = [1, 1]} : vector<8x1xf32> to vector<2x1xf32>
    %153 = vector.extract_strided_slice %139 {offsets = [2, 0], sizes = [1, 32], strides = [1, 1]} : vector<4x32xf32> to vector<1x32xf32>
    %154 = vector.broadcast %152 : vector<2x1xf32> to vector<2x32xf32>
    %155 = vector.broadcast %153 : vector<1x32xf32> to vector<2x32xf32>
    %156 = arith.mulf %154, %155 : vector<2x32xf32>
    %157 = arith.addf %151, %156 : vector<2x32xf32>
    %158 = vector.extract_strided_slice %20 {offsets = [4, 0], sizes = [2, 1], strides = [1, 1]} : vector<8x1xf32> to vector<2x1xf32>
    %159 = vector.extract_strided_slice %139 {offsets = [3, 0], sizes = [1, 32], strides = [1, 1]} : vector<4x32xf32> to vector<1x32xf32>
    %160 = vector.broadcast %158 : vector<2x1xf32> to vector<2x32xf32>
    %161 = vector.broadcast %159 : vector<1x32xf32> to vector<2x32xf32>
    %162 = arith.mulf %160, %161 : vector<2x32xf32>
    %163 = arith.addf %157, %162 : vector<2x32xf32>
    %164 = vector.extract_strided_slice %60 {offsets = [6, 0], sizes = [2, 6], strides = [1, 1]} : vector<8x6xf32> to vector<2x6xf32>
    %c3 = arith.constant 3 : index
    %c0_63 = arith.constant 0 : index
    %c0_64 = arith.constant 0 : index
    %165 = vector.load %arg12[%c3, %c0_63, %c0_64] : memref<4x6x32xf32, #tpu.memory_space<vmem>>, vector<1x6x32xf32>
    %166 = vector.shape_cast %165 : vector<1x6x32xf32> to vector<6x32xf32>
    %cst_65 = arith.constant dense<0.000000e+00> : vector<2x32xf32>
    %167 = tpu.matmul %164, %166, %cst_65 {dimension_numbers = #tpu.dot_dimension_numbers<[1], [0], [0], [1], [0, 0, 1, 1], [], []>} : vector<2x6xf32>, vector<6x32xf32>, vector<2x32xf32> -> vector<2x32xf32>
    %168 = arith.addf %163, %167 : vector<2x32xf32>
    %c3_66 = arith.constant 3 : index
    %c0_67 = arith.constant 0 : index
    %c0_68 = arith.constant 0 : index
    %169 = vector.load %arg13[%c3_66, %c0_67, %c0_68] : memref<4x4x32xf32, #tpu.memory_space<vmem>>, vector<1x4x32xf32>
    %170 = vector.shape_cast %169 : vector<1x4x32xf32> to vector<4x32xf32>
    %171 = vector.extract_strided_slice %4 {offsets = [6, 0], sizes = [2, 1], strides = [1, 1]} : vector<8x1xf32> to vector<2x1xf32>
    %172 = vector.extract_strided_slice %170 {offsets = [0, 0], sizes = [1, 32], strides = [1, 1]} : vector<4x32xf32> to vector<1x32xf32>
    %173 = vector.broadcast %171 : vector<2x1xf32> to vector<2x32xf32>
    %174 = vector.broadcast %172 : vector<1x32xf32> to vector<2x32xf32>
    %175 = arith.mulf %173, %174 : vector<2x32xf32>
    %176 = arith.addf %168, %175 : vector<2x32xf32>
    %177 = vector.extract_strided_slice %16 {offsets = [6, 0], sizes = [2, 1], strides = [1, 1]} : vector<8x1xf32> to vector<2x1xf32>
    %178 = vector.extract_strided_slice %170 {offsets = [1, 0], sizes = [1, 32], strides = [1, 1]} : vector<4x32xf32> to vector<1x32xf32>
    %179 = vector.broadcast %177 : vector<2x1xf32> to vector<2x32xf32>
    %180 = vector.broadcast %178 : vector<1x32xf32> to vector<2x32xf32>
    %181 = arith.mulf %179, %180 : vector<2x32xf32>
    %182 = arith.addf %176, %181 : vector<2x32xf32>
    %183 = vector.extract_strided_slice %18 {offsets = [6, 0], sizes = [2, 1], strides = [1, 1]} : vector<8x1xf32> to vector<2x1xf32>
    %184 = vector.extract_strided_slice %170 {offsets = [2, 0], sizes = [1, 32], strides = [1, 1]} : vector<4x32xf32> to vector<1x32xf32>
    %185 = vector.broadcast %183 : vector<2x1xf32> to vector<2x32xf32>
    %186 = vector.broadcast %184 : vector<1x32xf32> to vector<2x32xf32>
    %187 = arith.mulf %185, %186 : vector<2x32xf32>
    %188 = arith.addf %182, %187 : vector<2x32xf32>
    %189 = vector.extract_strided_slice %20 {offsets = [6, 0], sizes = [2, 1], strides = [1, 1]} : vector<8x1xf32> to vector<2x1xf32>
    %190 = vector.extract_strided_slice %170 {offsets = [3, 0], sizes = [1, 32], strides = [1, 1]} : vector<4x32xf32> to vector<1x32xf32>
    %191 = vector.broadcast %189 : vector<2x1xf32> to vector<2x32xf32>
    %192 = vector.broadcast %190 : vector<1x32xf32> to vector<2x32xf32>
    %193 = arith.mulf %191, %192 : vector<2x32xf32>
    %194 = arith.addf %188, %193 : vector<2x32xf32>
    %c0_69 = arith.constant 0 : index
    %c0_70 = arith.constant 0 : index
    %195 = vector.load %arg14[%c0_69, %c0_70] : memref<1x32xf32, #tpu.memory_space<vmem>>, vector<1x32xf32>
    %196 = vector.broadcast %195 : vector<1x32xf32> to vector<2x32xf32>
    %197 = arith.addf %194, %196 : vector<2x32xf32>
    %cst_71 = arith.constant 0.000000e+00 : f32
    %198 = vector.broadcast %cst_71 : f32 to vector<2x32xf32>
    %199 = arith.maximumf %197, %198 : vector<2x32xf32>
    %c0_72 = arith.constant 0 : index
    %c0_73 = arith.constant 0 : index
    %200 = vector.load %arg15[%c0_72, %c0_73] : memref<32x32xf32, #tpu.memory_space<vmem>>, vector<32x32xf32>
    %cst_74 = arith.constant dense<0.000000e+00> : vector<2x32xf32>
    %201 = tpu.matmul %199, %200, %cst_74 {dimension_numbers = #tpu.dot_dimension_numbers<[1], [0], [0], [1], [0, 0, 1, 1], [], []>} : vector<2x32xf32>, vector<32x32xf32>, vector<2x32xf32> -> vector<2x32xf32>
    %c0_75 = arith.constant 0 : index
    %c0_76 = arith.constant 0 : index
    %202 = vector.load %arg16[%c0_75, %c0_76] : memref<1x32xf32, #tpu.memory_space<vmem>>, vector<1x32xf32>
    %203 = vector.broadcast %202 : vector<1x32xf32> to vector<2x32xf32>
    %204 = arith.addf %201, %203 : vector<2x32xf32>
    %cst_77 = arith.constant 0.000000e+00 : f32
    %205 = vector.broadcast %cst_77 : f32 to vector<2x32xf32>
    %206 = arith.maximumf %204, %205 : vector<2x32xf32>
    %c0_78 = arith.constant 0 : index
    %c0_79 = arith.constant 0 : index
    %207 = vector.load %arg17[%c0_78, %c0_79] : memref<32x3xf32, #tpu.memory_space<vmem>>, vector<32x3xf32>
    %cst_80 = arith.constant dense<0.000000e+00> : vector<2x3xf32>
    %208 = tpu.matmul %206, %207, %cst_80 {dimension_numbers = #tpu.dot_dimension_numbers<[1], [0], [0], [1], [0, 0, 1, 1], [], []>} : vector<2x32xf32>, vector<32x3xf32>, vector<2x3xf32> -> vector<2x3xf32>
    %c0_81 = arith.constant 0 : index
    %c0_82 = arith.constant 0 : index
    %209 = vector.load %arg18[%c0_81, %c0_82] : memref<1x3xf32, #tpu.memory_space<vmem>>, vector<1x3xf32>
    %210 = vector.broadcast %209 : vector<1x3xf32> to vector<2x3xf32>
    %211 = arith.addf %208, %210 : vector<2x3xf32>
    %c0_83 = arith.constant 0 : index
    %c0_84 = arith.constant 0 : index
    %212 = vector.load %arg20[%c0_83, %c0_84] : memref<2x3xf32, #tpu.memory_space<vmem>>, vector<2x3xf32>
    tpu.vector_store %arg20[%c0_83, %c0_84], %211 {strides = array<i32>} : memref<2x3xf32, #tpu.memory_space<vmem>>, vector<2x3xf32>,
    return
  }
  func.func @transform_0(%arg0: i32) -> (i32, i32) {
    %c0_i32 = arith.constant 0 : i32
    %c0_i32_0 = arith.constant 0 : i32
    %c0_i32_1 = arith.constant 0 : i32
    return %c0_i32, %c0_i32_0 : i32, i32
  }
  func.func @transform_1(%arg0: i32) -> (i32, i32) {
    %c0_i32 = arith.constant 0 : i32
    %c0_i32_0 = arith.constant 0 : i32
    %c0_i32_1 = arith.constant 0 : i32
    return %c0_i32, %c0_i32_0 : i32, i32
  }
  func.func @transform_2(%arg0: i32) -> (i32, i32) {
    %c0_i32 = arith.constant 0 : i32
    %c0_i32_0 = arith.constant 0 : i32
    %c0_i32_1 = arith.constant 0 : i32
    return %c0_i32, %c0_i32_0 : i32, i32
  }
  func.func @transform_3(%arg0: i32) -> (i32, i32) {
    %c0_i32 = arith.constant 0 : i32
    %c0_i32_0 = arith.constant 0 : i32
    %c0_i32_1 = arith.constant 0 : i32
    return %c0_i32, %c0_i32_0 : i32, i32
  }
  func.func @transform_4(%arg0: i32) -> (i32, i32) {
    %c0_i32 = arith.constant 0 : i32
    %c0_i32_0 = arith.constant 0 : i32
    %c0_i32_1 = arith.constant 0 : i32
    return %c0_i32, %c0_i32_0 : i32, i32
  }
  func.func @transform_5(%arg0: i32) -> (i32, i32) {
    %c0_i32 = arith.constant 0 : i32
    %c0_i32_0 = arith.constant 0 : i32
    %c0_i32_1 = arith.constant 0 : i32
    return %c0_i32, %c0_i32_0 : i32, i32
  }
  func.func @transform_6(%arg0: i32) -> (i32, i32) {
    %c0_i32 = arith.constant 0 : i32
    %c0_i32_0 = arith.constant 0 : i32
    %c0_i32_1 = arith.constant 0 : i32
    return %c0_i32, %c0_i32_0 : i32, i32
  }
  func.func @transform_7(%arg0: i32) -> (i32, i32) {
    %c0_i32 = arith.constant 0 : i32
    %c0_i32_0 = arith.constant 0 : i32
    %c0_i32_1 = arith.constant 0 : i32
    return %c0_i32, %c0_i32_0 : i32, i32
  }
  func.func @transform_8(%arg0: i32) -> (i32, i32) {
    %c0_i32 = arith.constant 0 : i32
    %c0_i32_0 = arith.constant 0 : i32
    %c0_i32_1 = arith.constant 0 : i32
    return %c0_i32, %c0_i32_0 : i32, i32
  }
  func.func @transform_9(%arg0: i32) -> (i32, i32) {
    %c0_i32 = arith.constant 0 : i32
    %c0_i32_0 = arith.constant 0 : i32
    %c0_i32_1 = arith.constant 0 : i32
    return %c0_i32, %c0_i32_0 : i32, i32
  }
  func.func @transform_10(%arg0: i32) -> (i32, i32) {
    %c0_i32 = arith.constant 0 : i32
    %c0_i32_0 = arith.constant 0 : i32
    %c0_i32_1 = arith.constant 0 : i32
    return %c0_i32, %c0_i32_0 : i32, i32
  }
  func.func @transform_11(%arg0: i32) -> (i32, i32, i32) {
    %c0_i32 = arith.constant 0 : i32
    %c0_i32_0 = arith.constant 0 : i32
    %c0_i32_1 = arith.constant 0 : i32
    %c0_i32_2 = arith.constant 0 : i32
    return %c0_i32, %c0_i32_0, %c0_i32_1 : i32, i32, i32
  }
  func.func @transform_12(%arg0: i32) -> (i32, i32, i32) {
    %c0_i32 = arith.constant 0 : i32
    %c0_i32_0 = arith.constant 0 : i32
    %c0_i32_1 = arith.constant 0 : i32
    %c0_i32_2 = arith.constant 0 : i32
    return %c0_i32, %c0_i32_0, %c0_i32_1 : i32, i32, i32
  }
  func.func @transform_13(%arg0: i32) -> (i32, i32) {
    %c0_i32 = arith.constant 0 : i32
    %c0_i32_0 = arith.constant 0 : i32
    %c0_i32_1 = arith.constant 0 : i32
    return %c0_i32, %c0_i32_0 : i32, i32
  }
  func.func @transform_14(%arg0: i32) -> (i32, i32) {
    %c0_i32 = arith.constant 0 : i32
    %c0_i32_0 = arith.constant 0 : i32
    %c0_i32_1 = arith.constant 0 : i32
    return %c0_i32, %c0_i32_0 : i32, i32
  }
  func.func @transform_15(%arg0: i32) -> (i32, i32) {
    %c0_i32 = arith.constant 0 : i32
    %c0_i32_0 = arith.constant 0 : i32
    %c0_i32_1 = arith.constant 0 : i32
    return %c0_i32, %c0_i32_0 : i32, i32
  }
  func.func @transform_16(%arg0: i32) -> (i32, i32) {
    %c0_i32 = arith.constant 0 : i32
    %c0_i32_0 = arith.constant 0 : i32
    %c0_i32_1 = arith.constant 0 : i32
    return %c0_i32, %c0_i32_0 : i32, i32
  }
  func.func @transform_17(%arg0: i32) -> (i32, i32) {
    %c0_i32 = arith.constant 0 : i32
    %c0_i32_0 = arith.constant 0 : i32
    %c0_i32_1 = arith.constant 0 : i32
    return %c0_i32, %c0_i32_0 : i32, i32
  }
  func.func @transform_18(%arg0: i32) -> (i32, i32) {
    %c0_i32 = arith.constant 0 : i32
    %c0_i32_0 = arith.constant 0 : i32
    %c0_i32_1 = arith.constant 0 : i32
    return %c0_i32, %c0_i32_0 : i32, i32
  }
  func.func @transform_19(%arg0: i32) -> (i32, i32) {
    %c0_i32 = arith.constant 0 : i32
    %c0_i32_0 = arith.constant 0 : i32
    %c0_i32_1 = arith.constant 0 : i32
    return %c0_i32, %c0_i32_0 : i32, i32
  }
}

</mosaic_0001>

<llo_original>
// kernel: base_block_forward.1
$region0: #{base_block_forward.1}
  #allocation0 [shape = 'u32[]', space=smem, size = 0x4, offset = 0x4, fixed_abs, tag = 'smem constant byte address 0x4 - core index']
  #allocation1 [shape = 'u32[144,128]{1,0:T(1,128)}', space=vmem, size = 0x12000, scoped, tag = 'internal scratch']
  %s0 = inlined_call_operand.vmem [shape: f32[8,8], index: 0, kind: input, shape index: {}]
  %s1 = inlined_call_operand.hbm [shape: f32[8,32], index: 1, kind: input, shape index: {}]
  %s2 = inlined_call_operand.hbm [shape: f32[1,32], index: 2, kind: input, shape index: {}]
  %s3 = inlined_call_operand.vmem [shape: f32[32,32], index: 3, kind: input, shape index: {}]
  %s4 = inlined_call_operand.hbm [shape: f32[1,32], index: 4, kind: input, shape index: {}]
  %s5 = inlined_call_operand.vmem [shape: f32[32,32], index: 5, kind: input, shape index: {}]
  %s6 = inlined_call_operand.hbm [shape: f32[1,32], index: 6, kind: input, shape index: {}]
  %s7 = inlined_call_operand.vmem [shape: f32[32,32], index: 7, kind: input, shape index: {}]
  %s8 = inlined_call_operand.hbm [shape: f32[1,32], index: 8, kind: input, shape index: {}]
  %s9 = inlined_call_operand.vmem [shape: f32[32,6], index: 9, kind: input, shape index: {}]
  %s10 = inlined_call_operand.hbm [shape: f32[6,8], index: 10, kind: input, shape index: {}]
  %s11 = inlined_call_operand.vmem [shape: f32[4,6,32], index: 11, kind: input, shape index: {}]
  %s12 = inlined_call_operand.vmem [shape: f32[4,4,32], index: 12, kind: input, shape index: {}]
  %s13 = inlined_call_operand.hbm [shape: f32[1,32], index: 13, kind: input, shape index: {}]
  %s14 = inlined_call_operand.vmem [shape: f32[32,32], index: 14, kind: input, shape index: {}]
  %s15 = inlined_call_operand.hbm [shape: f32[1,32], index: 15, kind: input, shape index: {}]
  %s16 = inlined_call_operand.vmem [shape: f32[32,3], index: 16, kind: input, shape index: {}]
  %s17 = inlined_call_operand.hbm [shape: f32[1,3], index: 17, kind: input, shape index: {}]
  %s18 = inlined_call_operand.vmem [shape: f32[8,10], index: 18, kind: output, shape index: {0}]
  %s19 = inlined_call_operand.hbm [shape: f32[2,3], index: 19, kind: output, shape index: {1}]
  %20 = xla_tuple %s18, %s19
  %s21 = sld [smem:[#allocation0]]
  $region126: #{base_block_forward.1} parent=0
    _
  %s23 = ssub.s32 1, %s21
  %s24 = scalar_select 0, %s23, %s21
  $region1: #{base_block_forward.1} parent=0
    #allocation2 [shape = 'u8[4096]{0}', space=vmem, size = 0x1000, scoped, tag = 'input window, operand 1, single buffered']
    #allocation3 [shape = 's32[1]{0}', space=sflag, size = 0x4, scoped, tag = 'scoped memory for base_block_forward.1']
    #allocation4 [shape = 's32[1]{0}', space=sflag, size = 0x4, scoped, tag = 'scoped memory for base_block_forward.1']
    #allocation5 [shape = 'u8[512]{0}', space=vmem, size = 0x400, scoped, tag = 'input window, operand 2, single buffered']
    #allocation6 [shape = 's32[1]{0}', space=sflag, size = 0x4, scoped, tag = 'scoped memory for base_block_forward.1']
    #allocation7 [shape = 'u8[512]{0}', space=vmem, size = 0x400, scoped, tag = 'input window, operand 4, single buffered']
    #allocation8 [shape = 'u8[512]{0}', space=vmem, size = 0x400, scoped, tag = 'input window, operand 6, single buffered']
    #allocation9 [shape = 's32[1]{0}', space=sflag, size = 0x4, scoped, tag = 'scoped memory for base_block_forward.1']
    #allocation10 [shape = 'u8[512]{0}', space=vmem, size = 0x400, scoped, tag = 'input window, operand 8, single buffered']
    #allocation11 [shape = 'u8[4096]{0}', space=vmem, size = 0x1000, scoped, tag = 'input window, operand 10, single buffered']
    #allocation12 [shape = 's32[1]{0}', space=sflag, size = 0x4, scoped, tag = 'scoped memory for base_block_forward.1']
    #allocation13 [shape = 'u8[512]{0}', space=vmem, size = 0x400, scoped, tag = 'input window, operand 13, single buffered']
    #allocation14 [shape = 'u8[512]{0}', space=vmem, size = 0x400, scoped, tag = 'input window, operand 15, single buffered']
    #allocation15 [shape = 's32[1]{0}', space=sflag, size = 0x4, scoped, tag = 'scoped memory for base_block_forward.1']
    #allocation16 [shape = 'u8[512]{0}', space=vmem, size = 0x400, scoped, tag = 'input window, operand 17, single buffered']
    #allocation17 [shape = 'u8[1024]{0}', space=vmem, size = 0x400, scoped, tag = 'output window, operand 1, single buffered']
    %25 = vsyncpa [#allocation3], 0
    %26 = vsyncpa [#allocation6], 0
    %27 = vsyncpa [#allocation9], 0
    %28 = vsyncpa [#allocation12], 0
    %29 = vsyncpa [#allocation15], 0
    %30 = vsyncpa [#allocation4], 0
    // Predicated region
    $region2: #{base_block_forward.1} parent=1 // pred_check
      _
    $region3: #{base_block_forward.1} parent=1 // pred_check_branch
      %32 = sbr.rel (0) target = $region5
    $region4: #{base_block_forward.1} parent=1 // pred_region
      _
    $region5: #{base_block_forward.1} parent=1 // pred_fallthru
      _
    // Predicated region
    $region6: #{base_block_forward.1} parent=1 // pred_check
      _
    $region7: #{base_block_forward.1} parent=1 // pred_check_branch
      %34 = sbr.rel (0) target = $region9
    $region8: #{base_block_forward.1} parent=1 // pred_region
      %s36 = ssub.s32 128, 128
      %37 = vsyncadd [#allocation3], %s36
      %s39 = sshll.u32 [#allocation2], 4
      %s40 = int_to_ptr.vmem [resolvable:$true] %s39
      %42 = dma.hbm_to_vmem [thread:$0]  %s1, 128, %s40, [#allocation3]
    $region9: #{base_block_forward.1} parent=1 // pred_fallthru
      _
    // Predicated region
    $region10: #{base_block_forward.1} parent=1 // pred_check
      _
    $region11: #{base_block_forward.1} parent=1 // pred_check_branch
      %44 = sbr.rel (0) target = $region13
    $region12: #{base_block_forward.1} parent=1 // pred_region
      %s46 = ssub.s32 16, 16
      %47 = vsyncadd [#allocation6], %s46
      %s49 = sshll.u32 [#allocation5], 4
      %s50 = int_to_ptr.vmem [resolvable:$true] %s49
      %52 = dma.hbm_to_vmem [thread:$0]  %s2, 16, %s50, [#allocation6]
    $region13: #{base_block_forward.1} parent=1 // pred_fallthru
      _
    // Predicated region
    $region14: #{base_block_forward.1} parent=1 // pred_check
      _
    $region15: #{base_block_forward.1} parent=1 // pred_check_branch
      %54 = sbr.rel (0) target = $region17
    $region16: #{base_block_forward.1} parent=1 // pred_region
      _
    $region17: #{base_block_forward.1} parent=1 // pred_fallthru
      _
    // Predicated region
    $region18: #{base_block_forward.1} parent=1 // pred_check
      _
    $region19: #{base_block_forward.1} parent=1 // pred_check_branch
      %56 = sbr.rel (0) target = $region21
    $region20: #{base_block_forward.1} parent=1 // pred_region
      %s58 = ssub.s32 16, 16
      %59 = vsyncadd [#allocation6], %s58
      %s61 = sshll.u32 [#allocation7], 4
      %s62 = int_to_ptr.vmem [resolvable:$true] %s61
      %64 = dma.hbm_to_vmem [thread:$0]  %s4, 16, %s62, [#allocation6]
    $region21: #{base_block_forward.1} parent=1 // pred_fallthru
      _
    // Predicated region
    $region22: #{base_block_forward.1} parent=1 // pred_check
      _
    $region23: #{base_block_forward.1} parent=1 // pred_check_branch
      %66 = sbr.rel (0) target = $region25
    $region24: #{base_block_forward.1} parent=1 // pred_region
      _
    $region25: #{base_block_forward.1} parent=1 // pred_fallthru
      _
    // Predicated region
    $region26: #{base_block_forward.1} parent=1 // pred_check
      _
    $region27: #{base_block_forward.1} parent=1 // pred_check_branch
      %68 = sbr.rel (0) target = $region29
    $region28: #{base_block_forward.1} parent=1 // pred_region
      %s70 = ssub.s32 16, 16
      %71 = vsyncadd [#allocation9], %s70
      %s73 = sshll.u32 [#allocation8], 4
      %s74 = int_to_ptr.vmem [resolvable:$true] %s73
      %76 = dma.hbm_to_vmem [thread:$0]  %s6, 16, %s74, [#allocation9]
    $region29: #{base_block_forward.1} parent=1 // pred_fallthru
      _
    // Predicated region
    $region30: #{base_block_forward.1} parent=1 // pred_check
      _
    $region31: #{base_block_forward.1} parent=1 // pred_check_branch
      %78 = sbr.rel (0) target = $region33
    $region32: #{base_block_forward.1} parent=1 // pred_region
      _
    $region33: #{base_block_forward.1} parent=1 // pred_fallthru
      _
    // Predicated region
    $region34: #{base_block_forward.1} parent=1 // pred_check
      _
    $region35: #{base_block_forward.1} parent=1 // pred_check_branch
      %80 = sbr.rel (0) target = $region37
    $region36: #{base_block_forward.1} parent=1 // pred_region
      %s82 = ssub.s32 16, 16
      %83 = vsyncadd [#allocation9], %s82
      %s85 = sshll.u32 [#allocation10], 4
      %s86 = int_to_ptr.vmem [resolvable:$true] %s85
      %88 = dma.hbm_to_vmem [thread:$0]  %s8, 16, %s86, [#allocation9]
    $region37: #{base_block_forward.1} parent=1 // pred_fallthru
      _
    // Predicated region
    $region38: #{base_block_forward.1} parent=1 // pred_check
      _
    $region39: #{base_block_forward.1} parent=1 // pred_check_branch
      %90 = sbr.rel (0) target = $region41
    $region40: #{base_block_forward.1} parent=1 // pred_region
      _
    $region41: #{base_block_forward.1} parent=1 // pred_fallthru
      _
    // Predicated region
    $region42: #{base_block_forward.1} parent=1 // pred_check
      _
    $region43: #{base_block_forward.1} parent=1 // pred_check_branch
      %92 = sbr.rel (0) target = $region45
    $region44: #{base_block_forward.1} parent=1 // pred_region
      %s94 = ssub.s32 128, 128
      %95 = vsyncadd [#allocation12], %s94
      %s97 = sshll.u32 [#allocation11], 4
      %s98 = int_to_ptr.vmem [resolvable:$true] %s97
      %100 = dma.hbm_to_vmem [thread:$0]  %s10, 128, %s98, [#allocation12]
    $region45: #{base_block_forward.1} parent=1 // pred_fallthru
      _
    // Predicated region
    $region46: #{base_block_forward.1} parent=1 // pred_check
      _
    $region47: #{base_block_forward.1} parent=1 // pred_check_branch
      %102 = sbr.rel (0) target = $region49
    $region48: #{base_block_forward.1} parent=1 // pred_region
      _
    $region49: #{base_block_forward.1} parent=1 // pred_fallthru
      _
    // Predicated region
    $region50: #{base_block_forward.1} parent=1 // pred_check
      _
    $region51: #{base_block_forward.1} parent=1 // pred_check_branch
      %104 = sbr.rel (0) target = $region53
    $region52: #{base_block_forward.1} parent=1 // pred_region
      _
    $region53: #{base_block_forward.1} parent=1 // pred_fallthru
      _
    // Predicated region
    $region54: #{base_block_forward.1} parent=1 // pred_check
      _
    $region55: #{base_block_forward.1} parent=1 // pred_check_branch
      %106 = sbr.rel (0) target = $region57
    $region56: #{base_block_forward.1} parent=1 // pred_region
      %s108 = ssub.s32 16, 16
      %109 = vsyncadd [#allocation12], %s108
      %s111 = sshll.u32 [#allocation13], 4
      %s112 = int_to_ptr.vmem [resolvable:$true] %s111
      %114 = dma.hbm_to_vmem [thread:$0]  %s13, 16, %s112, [#allocation12]
    $region57: #{base_block_forward.1} parent=1 // pred_fallthru
      _
    // Predicated region
    $region58: #{base_block_forward.1} parent=1 // pred_check
      _
    $region59: #{base_block_forward.1} parent=1 // pred_check_branch
      %116 = sbr.rel (0) target = $region61
    $region60: #{base_block_forward.1} parent=1 // pred_region
      _
    $region61: #{base_block_forward.1} parent=1 // pred_fallthru
      _
    // Predicated region
    $region62: #{base_block_forward.1} parent=1 // pred_check
      _
    $region63: #{base_block_forward.1} parent=1 // pred_check_branch
      %118 = sbr.rel (0) target = $region65
    $region64: #{base_block_forward.1} parent=1 // pred_region
      %s120 = ssub.s32 16, 16
      %121 = vsyncadd [#allocation15], %s120
      %s123 = sshll.u32 [#allocation14], 4
      %s124 = int_to_ptr.vmem [resolvable:$true] %s123
      %126 = dma.hbm_to_vmem [thread:$0]  %s15, 16, %s124, [#allocation15]
    $region65: #{base_block_forward.1} parent=1 // pred_fallthru
      _
    // Predicated region
    $region66: #{base_block_forward.1} parent=1 // pred_check
      _
    $region67: #{base_block_forward.1} parent=1 // pred_check_branch
      %128 = sbr.rel (0) target = $region69
    $region68: #{base_block_forward.1} parent=1 // pred_region
      _
    $region69: #{base_block_forward.1} parent=1 // pred_fallthru
      _
    // Predicated region
    $region70: #{base_block_forward.1} parent=1 // pred_check
      _
    $region71: #{base_block_forward.1} parent=1 // pred_check_branch
      %130 = sbr.rel (0) target = $region73
    $region72: #{base_block_forward.1} parent=1 // pred_region
      %s132 = ssub.s32 16, 16
      %133 = vsyncadd [#allocation15], %s132
      %s135 = sshll.u32 [#allocation16], 4
      %s136 = int_to_ptr.vmem [resolvable:$true] %s135
      %138 = dma.hbm_to_vmem [thread:$0]  %s17, 16, %s136, [#allocation15]
    $region73: #{base_block_forward.1} parent=1 // pred_fallthru
      _
    // Predicated region
    $region74: #{base_block_forward.1} parent=1 // pred_check
      _
    $region75: #{base_block_forward.1} parent=1 // pred_check_branch
      %140 = sbr.rel (0) target = $region77
    $region76: #{base_block_forward.1} parent=1 // pred_region
      %141 = dma.done [#allocation3], 128
    $region77: #{base_block_forward.1} parent=1 // pred_fallthru
      _
    // Predicated region
    $region78: #{base_block_forward.1} parent=1 // pred_check
      _
    $region79: #{base_block_forward.1} parent=1 // pred_check_branch
      %143 = sbr.rel (0) target = $region81
    $region80: #{base_block_forward.1} parent=1 // pred_region
      %144 = dma.done [#allocation6], 16
    $region81: #{base_block_forward.1} parent=1 // pred_fallthru
      _
    // Predicated region
    $region82: #{base_block_forward.1} parent=1 // pred_check
      _
    $region83: #{base_block_forward.1} parent=1 // pred_check_branch
      %146 = sbr.rel (0) target = $region85
    $region84: #{base_block_forward.1} parent=1 // pred_region
      %147 = dma.done [#allocation6], 16
    $region85: #{base_block_forward.1} parent=1 // pred_fallthru
      _
    // Predicated region
    $region86: #{base_block_forward.1} parent=1 // pred_check
      _
    $region87: #{base_block_forward.1} parent=1 // pred_check_branch
      %149 = sbr.rel (0) target = $region89
    $region88: #{base_block_forward.1} parent=1 // pred_region
      %150 = dma.done [#allocation9], 16
    $region89: #{base_block_forward.1} parent=1 // pred_fallthru
      _
    // Predicated region
    $region90: #{base_block_forward.1} parent=1 // pred_check
      _
    $region91: #{base_block_forward.1} parent=1 // pred_check_branch
      %152 = sbr.rel (0) target = $region93
    $region92: #{base_block_forward.1} parent=1 // pred_region
      %153 = dma.done [#allocation9], 16
    $region93: #{base_block_forward.1} parent=1 // pred_fallthru
      _
    // Predicated region
    $region94: #{base_block_forward.1} parent=1 // pred_check
      _
    $region95: #{base_block_forward.1} parent=1 // pred_check_branch
      %155 = sbr.rel (0) target = $region97
    $region96: #{base_block_forward.1} parent=1 // pred_region
      %156 = dma.done [#allocation12], 128
    $region97: #{base_block_forward.1} parent=1 // pred_fallthru
      _
    // Predicated region
    $region98: #{base_block_forward.1} parent=1 // pred_check
      _
    $region99: #{base_block_forward.1} parent=1 // pred_check_branch
      %158 = sbr.rel (0) target = $region101
    $region100: #{base_block_forward.1} parent=1 // pred_region
      %159 = dma.done [#allocation12], 16
    $region101: #{base_block_forward.1} parent=1 // pred_fallthru
      _
    // Predicated region
    $region102: #{base_block_forward.1} parent=1 // pred_check
      _
    $region103: #{base_block_forward.1} parent=1 // pred_check_branch
      %161 = sbr.rel (0) target = $region105
    $region104: #{base_block_forward.1} parent=1 // pred_region
      %162 = dma.done [#allocation15], 16
    $region105: #{base_block_forward.1} parent=1 // pred_fallthru
      _
    // Predicated region
    $region106: #{base_block_forward.1} parent=1 // pred_check
      _
    $region107: #{base_block_forward.1} parent=1 // pred_check_branch
      %164 = sbr.rel (0) target = $region109
    $region108: #{base_block_forward.1} parent=1 // pred_region
      %165 = dma.done [#allocation15], 16
    $region109: #{base_block_forward.1} parent=1 // pred_fallthru
      _
    %v166 = vld [vmem:[%s0] sm:$0xff]
    %vm167 = vcmask 64512
    %v168 = vsel %vm167, %v166, 0.0
    %169 = vadd.xlane.f32.xlu0 %v168
    %v170 = vpop.xlane.xlu0 %169
    %v171 = vmul.f32 %v170, 0.125
    %v172 = vmul.f32 %v166, %v166
    %v173 = vsel %vm167, %v172, 0.0
    %174 = vadd.xlane.f32.xlu0 %v173
    %v175 = vpop.xlane.xlu0 %174
    %v176 = vmul.f32 %v175, 0.125
    %v177 = vmul.f32 %v171, %v171
    %v178 = vsub.f32 %v176, %v177
    %v179 = vmax.f32 %v178, 0.0
    %v180 = vrsqrt.pop %v179
    %v181 = vmul.f32 %v179, %v180
    %vm182 = vcmp.eq.f32.partialorder %v179, inf
    %v183 = vsel %vm182, %v179, %v181
    %vm184 = vcmp.eq.f32.partialorder %v179, 0.0
    %v185 = vand.u32 %v179, 2147483648
    %v186 = vsel %vm184, %v185, %v183
    %v187 = vadd.f32 %v186, 1e-05
    %v188 = vsel %vm167, %v166, inf
    %189 = vmin.xlane.f32.xlu0 %v188
    %v190 = vpop.xlane.xlu0 %189
    %v191 = vsel %vm167, %v166, -inf
    %192 = vmax.xlane.f32.xlu0 %v191
    %v193 = vpop.xlane.xlu0 %192
    %v194 = vrcp.pop %v187
    %v195 = vmul.f32 %v187, %v194
    %v196 = vsub.f32 2.0, %v195
    %v197 = vmul.f32 %v194, %v196
    %v198 = vsub.f32 %v166, %v171
    %v199 = vmul.f32 %v198, %v197
    %v200 = vld [vmem:[#allocation2] sm:$0xff]
    %v201 = vld [vmem:[#allocation5] sm:$0x1]
    %v203 = vlaneseq
    %v204 = vshrl.u32 %v203, 7
    %v205 = vsub.s32 0, %v204
    %v206 = vrot.slane %v201, %v205
    %v209 = vsel %vm167, %v199, 0
    %211 = vmatprep.subr.mxu0 0.0
    %212 = vmatpush1.msra.mxu0 0.0
    %213 = vmatprep.subr.mxu0 0.0
    %214 = vmatpush1.msra.mxu0 0.0
    %215 = vmatprep.subr.mxu0 0.0
    %216 = vmatpush1.msra.mxu0 0.0
    %217 = vmatprep.subr.mxu0 0.0
    %218 = vmatpush1.msra.mxu0 0.0
    %219 = vmatprep.subr.mxu0 0.0
    %220 = vmatpush1.msra.mxu0 0.0
    %221 = vmatprep.subr.mxu0 0.0
    %222 = vmatpush1.msra.mxu0 0.0
    %223 = vmatprep.subr.mxu0 0.0
    %224 = vmatpush1.msra.mxu0 0.0
    %225 = vmatprep.subr.mxu0 0.0
    %226 = vmatpush1.msra.mxu0 0.0
    %227 = vmatprep.subr.mxu0 0.0
    %228 = vmatpush1.msra.mxu0 0.0
    %229 = vmatprep.subr.mxu0 0.0
    %230 = vmatpush1.msra.mxu0 0.0
    %231 = vmatprep.subr.mxu0 0.0
    %232 = vmatpush1.msra.mxu0 0.0
    %233 = vmatprep.subr.mxu0 0.0
    %234 = vmatpush1.msra.mxu0 0.0
    %235 = vmatprep.subr.mxu0 0.0
    %236 = vmatpush1.msra.mxu0 0.0
    %237 = vmatprep.subr.mxu0 0.0
    %238 = vmatpush1.msra.mxu0 0.0
    %239 = vmatprep.subr.mxu0 0.0
    %240 = vmatpush1.msra.mxu0 0.0
    %241 = vmatprep.subr.mxu0 0.0
    %242 = vmatpush1.msra.mxu0 %v200
    %243 = vmatprep.subr.mxu0 0.0
    %244 = vmatpush2.msra.mxu0 0.0
    %245 = vmatprep.subr.mxu0 0.0
    %246 = vmatpush2.msra.mxu0 0.0
    %247 = vmatprep.subr.mxu0 0.0
    %248 = vmatpush2.msra.mxu0 0.0
    %249 = vmatprep.subr.mxu0 0.0
    %250 = vmatpush2.msra.mxu0 0.0
    %251 = vmatprep.subr.mxu0 0.0
    %252 = vmatpush2.msra.mxu0 0.0
    %253 = vmatprep.subr.mxu0 0.0
    %254 = vmatpush2.msra.mxu0 0.0
    %255 = vmatprep.subr.mxu0 0.0
    %256 = vmatpush2.msra.mxu0 0.0
    %257 = vmatprep.subr.mxu0 0.0
    %258 = vmatpush2.msra.mxu0 0.0
    %259 = vmatprep.subr.mxu0 0.0
    %260 = vmatpush2.msra.mxu0 0.0
    %261 = vmatprep.subr.mxu0 0.0
    %262 = vmatpush2.msra.mxu0 0.0
    %263 = vmatprep.subr.mxu0 0.0
    %264 = vmatpush2.msra.mxu0 0.0
    %265 = vmatprep.subr.mxu0 0.0
    %266 = vmatpush2.msra.mxu0 0.0
    %267 = vmatprep.subr.mxu0 0.0
    %268 = vmatpush2.msra.mxu0 0.0
    %269 = vmatprep.subr.mxu0 0.0
    %270 = vmatpush2.msra.mxu0 0.0
    %271 = vmatprep.subr.mxu0 0.0
    %272 = vmatpush2.msra.mxu0 0.0
    %273 = vmatprep.subr.mxu0 0.0
    %274 = vmatpush2.msra.mxu0 0.0
    %275 = vmatprep.mubr.f32.mxu0 0.0
    %276 = vmatmul.mubr.f32.gmra.mxu0 %v209
    %v277 = vpop.f32.mrf.mxu0
    %v278 = vadd.f32 %v206, %v277
    %v279 = vpop.f32.mrf.mxu0
    %280 = vdwg.mxu0
    %v281 = vmax.f32 %v278, 0.0
    %v282 = vld [vmem:[%s3] sm:$0xff]
    %v283 = vld [vmem:[%s3 + $0x8] sm:$0xff]
    %v284 = vld [vmem:[%s3 + $0x10] sm:$0xff]
    %v285 = vld [vmem:[%s3 + $0x18] sm:$0xff]
    %v286 = vld [vmem:[#allocation7] sm:$0x1]
    %v288 = vlaneseq
    %v289 = vshrl.u32 %v288, 7
    %v290 = vsub.s32 0, %v289
    %v291 = vrot.slane %v286, %v290
    %vm293 = vcmask 261120
    %v295 = vsel %vm293, %v281, 0
    %297 = vmatprep.subr.mxu0 0.0
    %298 = vmatpush1.msra.mxu0 0.0
    %299 = vmatprep.subr.mxu0 0.0
    %300 = vmatpush1.msra.mxu0 0.0
    %301 = vmatprep.subr.mxu0 0.0
    %302 = vmatpush1.msra.mxu0 0.0
    %303 = vmatprep.subr.mxu0 0.0
    %304 = vmatpush1.msra.mxu0 0.0
    %305 = vmatprep.subr.mxu0 0.0
    %306 = vmatpush1.msra.mxu0 0.0
    %307 = vmatprep.subr.mxu0 0.0
    %308 = vmatpush1.msra.mxu0 0.0
    %309 = vmatprep.subr.mxu0 0.0
    %310 = vmatpush1.msra.mxu0 0.0
    %311 = vmatprep.subr.mxu0 0.0
    %312 = vmatpush1.msra.mxu0 0.0
    %313 = vmatprep.subr.mxu0 0.0
    %314 = vmatpush1.msra.mxu0 0.0
    %315 = vmatprep.subr.mxu0 0.0
    %316 = vmatpush1.msra.mxu0 0.0
    %317 = vmatprep.subr.mxu0 0.0
    %318 = vmatpush1.msra.mxu0 0.0
    %319 = vmatprep.subr.mxu0 0.0
    %320 = vmatpush1.msra.mxu0 0.0
    %321 = vmatprep.subr.mxu0 0.0
    %322 = vmatpush1.msra.mxu0 %v285
    %323 = vmatprep.subr.mxu0 0.0
    %324 = vmatpush1.msra.mxu0 %v284
    %325 = vmatprep.subr.mxu0 0.0
    %326 = vmatpush1.msra.mxu0 %v283
    %327 = vmatprep.subr.mxu0 0.0
    %328 = vmatpush1.msra.mxu0 %v282
    %329 = vmatprep.subr.mxu0 0.0
    %330 = vmatpush2.msra.mxu0 0.0
    %331 = vmatprep.subr.mxu0 0.0
    %332 = vmatpush2.msra.mxu0 0.0
    %333 = vmatprep.subr.mxu0 0.0
    %334 = vmatpush2.msra.mxu0 0.0
    %335 = vmatprep.subr.mxu0 0.0
    %336 = vmatpush2.msra.mxu0 0.0
    %337 = vmatprep.subr.mxu0 0.0
    %338 = vmatpush2.msra.mxu0 0.0
    %339 = vmatprep.subr.mxu0 0.0
    %340 = vmatpush2.msra.mxu0 0.0
    %341 = vmatprep.subr.mxu0 0.0
    %342 = vmatpush2.msra.mxu0 0.0
    %343 = vmatprep.subr.mxu0 0.0
    %344 = vmatpush2.msra.mxu0 0.0
    %345 = vmatprep.subr.mxu0 0.0
    %346 = vmatpush2.msra.mxu0 0.0
    %347 = vmatprep.subr.mxu0 0.0
    %348 = vmatpush2.msra.mxu0 0.0
    %349 = vmatprep.subr.mxu0 0.0
    %350 = vmatpush2.msra.mxu0 0.0
    %351 = vmatprep.subr.mxu0 0.0
    %352 = vmatpush2.msra.mxu0 0.0
    %353 = vmatprep.subr.mxu0 0.0
    %354 = vmatpush2.msra.mxu0 0.0
    %355 = vmatprep.subr.mxu0 0.0
    %356 = vmatpush2.msra.mxu0 0.0
    %357 = vmatprep.subr.mxu0 0.0
    %358 = vmatpush2.msra.mxu0 0.0
    %359 = vmatprep.subr.mxu0 0.0
    %360 = vmatpush2.msra.mxu0 0.0
    %361 = vmatprep.mubr.f32.mxu0 0.0
    %362 = vmatmul.mubr.f32.gmra.mxu0 %v295
    %v363 = vpop.f32.mrf.mxu0
    %v364 = vadd.f32 %v291, %v363
    %v365 = vpop.f32.mrf.mxu0
    %366 = vdwg.mxu0
    %v367 = vmax.f32 %v364, 0.0
    %v368 = vld [vmem:[%s5] sm:$0xff]
    %v369 = vld [vmem:[%s5 + $0x8] sm:$0xff]
    %v370 = vld [vmem:[%s5 + $0x10] sm:$0xff]
    %v371 = vld [vmem:[%s5 + $0x18] sm:$0xff]
    %v372 = vld [vmem:[#allocation8] sm:$0x1]
    %v374 = vlaneseq
    %v375 = vshrl.u32 %v374, 7
    %v376 = vsub.s32 0, %v375
    %v377 = vrot.slane %v372, %v376
    %v380 = vsel %vm293, %v367, 0
    %382 = vmatprep.subr.mxu0 0.0
    %383 = vmatpush1.msra.mxu0 0.0
    %384 = vmatprep.subr.mxu0 0.0
    %385 = vmatpush1.msra.mxu0 0.0
    %386 = vmatprep.subr.mxu0 0.0
    %387 = vmatpush1.msra.mxu0 0.0
    %388 = vmatprep.subr.mxu0 0.0
    %389 = vmatpush1.msra.mxu0 0.0
    %390 = vmatprep.subr.mxu0 0.0
    %391 = vmatpush1.msra.mxu0 0.0
    %392 = vmatprep.subr.mxu0 0.0
    %393 = vmatpush1.msra.mxu0 0.0
    %394 = vmatprep.subr.mxu0 0.0
    %395 = vmatpush1.msra.mxu0 0.0
    %396 = vmatprep.subr.mxu0 0.0
    %397 = vmatpush1.msra.mxu0 0.0
    %398 = vmatprep.subr.mxu0 0.0
    %399 = vmatpush1.msra.mxu0 0.0
    %400 = vmatprep.subr.mxu0 0.0
    %401 = vmatpush1.msra.mxu0 0.0
    %402 = vmatprep.subr.mxu0 0.0
    %403 = vmatpush1.msra.mxu0 0.0
    %404 = vmatprep.subr.mxu0 0.0
    %405 = vmatpush1.msra.mxu0 0.0
    %406 = vmatprep.subr.mxu0 0.0
    %407 = vmatpush1.msra.mxu0 %v371
    %408 = vmatprep.subr.mxu0 0.0
    %409 = vmatpush1.msra.mxu0 %v370
    %410 = vmatprep.subr.mxu0 0.0
    %411 = vmatpush1.msra.mxu0 %v369
    %412 = vmatprep.subr.mxu0 0.0
    %413 = vmatpush1.msra.mxu0 %v368
    %414 = vmatprep.subr.mxu0 0.0
    %415 = vmatpush2.msra.mxu0 0.0
    %416 = vmatprep.subr.mxu0 0.0
    %417 = vmatpush2.msra.mxu0 0.0
    %418 = vmatprep.subr.mxu0 0.0
    %419 = vmatpush2.msra.mxu0 0.0
    %420 = vmatprep.subr.mxu0 0.0
    %421 = vmatpush2.msra.mxu0 0.0
    %422 = vmatprep.subr.mxu0 0.0
    %423 = vmatpush2.msra.mxu0 0.0
    %424 = vmatprep.subr.mxu0 0.0
    %425 = vmatpush2.msra.mxu0 0.0
    %426 = vmatprep.subr.mxu0 0.0
    %427 = vmatpush2.msra.mxu0 0.0
    %428 = vmatprep.subr.mxu0 0.0
    %429 = vmatpush2.msra.mxu0 0.0
    %430 = vmatprep.subr.mxu0 0.0
    %431 = vmatpush2.msra.mxu0 0.0
    %432 = vmatprep.subr.mxu0 0.0
    %433 = vmatpush2.msra.mxu0 0.0
    %434 = vmatprep.subr.mxu0 0.0
    %435 = vmatpush2.msra.mxu0 0.0
    %436 = vmatprep.subr.mxu0 0.0
    %437 = vmatpush2.msra.mxu0 0.0
    %438 = vmatprep.subr.mxu0 0.0
    %439 = vmatpush2.msra.mxu0 0.0
    %440 = vmatprep.subr.mxu0 0.0
    %441 = vmatpush2.msra.mxu0 0.0
    %442 = vmatprep.subr.mxu0 0.0
    %443 = vmatpush2.msra.mxu0 0.0
    %444 = vmatprep.subr.mxu0 0.0
    %445 = vmatpush2.msra.mxu0 0.0
    %446 = vmatprep.mubr.f32.mxu0 0.0
    %447 = vmatmul.mubr.f32.gmra.mxu0 %v380
    %v448 = vpop.f32.mrf.mxu0
    %v449 = vadd.f32 %v377, %v448
    %v450 = vpop.f32.mrf.mxu0
    %451 = vdwg.mxu0
    %v452 = vmax.f32 %v449, 0.0
    %v453 = vld [vmem:[%s7] sm:$0xff]
    %v454 = vld [vmem:[%s7 + $0x8] sm:$0xff]
    %v455 = vld [vmem:[%s7 + $0x10] sm:$0xff]
    %v456 = vld [vmem:[%s7 + $0x18] sm:$0xff]
    %v457 = vld [vmem:[#allocation10] sm:$0x1]
    %v459 = vlaneseq
    %v460 = vshrl.u32 %v459, 7
    %v461 = vsub.s32 0, %v460
    %v462 = vrot.slane %v457, %v461
    %v465 = vsel %vm293, %v452, 0
    %467 = vmatprep.subr.mxu0 0.0
    %468 = vmatpush1.msra.mxu0 0.0
    %469 = vmatprep.subr.mxu0 0.0
    %470 = vmatpush1.msra.mxu0 0.0
    %471 = vmatprep.subr.mxu0 0.0
    %472 = vmatpush1.msra.mxu0 0.0
    %473 = vmatprep.subr.mxu0 0.0
    %474 = vmatpush1.msra.mxu0 0.0
    %475 = vmatprep.subr.mxu0 0.0
    %476 = vmatpush1.msra.mxu0 0.0
    %477 = vmatprep.subr.mxu0 0.0
    %478 = vmatpush1.msra.mxu0 0.0
    %479 = vmatprep.subr.mxu0 0.0
    %480 = vmatpush1.msra.mxu0 0.0
    %481 = vmatprep.subr.mxu0 0.0
    %482 = vmatpush1.msra.mxu0 0.0
    %483 = vmatprep.subr.mxu0 0.0
    %484 = vmatpush1.msra.mxu0 0.0
    %485 = vmatprep.subr.mxu0 0.0
    %486 = vmatpush1.msra.mxu0 0.0
    %487 = vmatprep.subr.mxu0 0.0
    %488 = vmatpush1.msra.mxu0 0.0
    %489 = vmatprep.subr.mxu0 0.0
    %490 = vmatpush1.msra.mxu0 0.0
    %491 = vmatprep.subr.mxu0 0.0
    %492 = vmatpush1.msra.mxu0 %v456
    %493 = vmatprep.subr.mxu0 0.0
    %494 = vmatpush1.msra.mxu0 %v455
    %495 = vmatprep.subr.mxu0 0.0
    %496 = vmatpush1.msra.mxu0 %v454
    %497 = vmatprep.subr.mxu0 0.0
    %498 = vmatpush1.msra.mxu0 %v453
    %499 = vmatprep.subr.mxu0 0.0
    %500 = vmatpush2.msra.mxu0 0.0
    %501 = vmatprep.subr.mxu0 0.0
    %502 = vmatpush2.msra.mxu0 0.0
    %503 = vmatprep.subr.mxu0 0.0
    %504 = vmatpush2.msra.mxu0 0.0
    %505 = vmatprep.subr.mxu0 0.0
    %506 = vmatpush2.msra.mxu0 0.0
    %507 = vmatprep.subr.mxu0 0.0
    %508 = vmatpush2.msra.mxu0 0.0
    %509 = vmatprep.subr.mxu0 0.0
    %510 = vmatpush2.msra.mxu0 0.0
    %511 = vmatprep.subr.mxu0 0.0
    %512 = vmatpush2.msra.mxu0 0.0
    %513 = vmatprep.subr.mxu0 0.0
    %514 = vmatpush2.msra.mxu0 0.0
    %515 = vmatprep.subr.mxu0 0.0
    %516 = vmatpush2.msra.mxu0 0.0
    %517 = vmatprep.subr.mxu0 0.0
    %518 = vmatpush2.msra.mxu0 0.0
    %519 = vmatprep.subr.mxu0 0.0
    %520 = vmatpush2.msra.mxu0 0.0
    %521 = vmatprep.subr.mxu0 0.0
    %522 = vmatpush2.msra.mxu0 0.0
    %523 = vmatprep.subr.mxu0 0.0
    %524 = vmatpush2.msra.mxu0 0.0
    %525 = vmatprep.subr.mxu0 0.0
    %526 = vmatpush2.msra.mxu0 0.0
    %527 = vmatprep.subr.mxu0 0.0
    %528 = vmatpush2.msra.mxu0 0.0
    %529 = vmatprep.subr.mxu0 0.0
    %530 = vmatpush2.msra.mxu0 0.0
    %531 = vmatprep.mubr.f32.mxu0 0.0
    %532 = vmatmul.mubr.f32.gmra.mxu0 %v465
    %v533 = vpop.f32.mrf.mxu0
    %v534 = vadd.f32 %v462, %v533
    %v535 = vpop.f32.mrf.mxu0
    %536 = vdwg.mxu0
    %v537 = vmax.f32 %v534, 0.0
    %v538 = vld [vmem:[%s9] sm:$0xff]
    %v539 = vld [vmem:[%s9 + $0x8] sm:$0xff]
    %v540 = vld [vmem:[%s9 + $0x10] sm:$0xff]
    %v541 = vld [vmem:[%s9 + $0x18] sm:$0xff]
    %v543 = vsel %vm293, %v537, 0
    %545 = vmatprep.subr.mxu0 0.0
    %546 = vmatpush1.msra.mxu0 0.0
    %547 = vmatprep.subr.mxu0 0.0
    %548 = vmatpush1.msra.mxu0 0.0
    %549 = vmatprep.subr.mxu0 0.0
    %550 = vmatpush1.msra.mxu0 0.0
    %551 = vmatprep.subr.mxu0 0.0
    %552 = vmatpush1.msra.mxu0 0.0
    %553 = vmatprep.subr.mxu0 0.0
    %554 = vmatpush1.msra.mxu0 0.0
    %555 = vmatprep.subr.mxu0 0.0
    %556 = vmatpush1.msra.mxu0 0.0
    %557 = vmatprep.subr.mxu0 0.0
    %558 = vmatpush1.msra.mxu0 0.0
    %559 = vmatprep.subr.mxu0 0.0
    %560 = vmatpush1.msra.mxu0 0.0
    %561 = vmatprep.subr.mxu0 0.0
    %562 = vmatpush1.msra.mxu0 0.0
    %563 = vmatprep.subr.mxu0 0.0
    %564 = vmatpush1.msra.mxu0 0.0
    %565 = vmatprep.subr.mxu0 0.0
    %566 = vmatpush1.msra.mxu0 0.0
    %567 = vmatprep.subr.mxu0 0.0
    %568 = vmatpush1.msra.mxu0 0.0
    %569 = vmatprep.subr.mxu0 0.0
    %570 = vmatpush1.msra.mxu0 %v541
    %571 = vmatprep.subr.mxu0 0.0
    %572 = vmatpush1.msra.mxu0 %v540
    %573 = vmatprep.subr.mxu0 0.0
    %574 = vmatpush1.msra.mxu0 %v539
    %575 = vmatprep.subr.mxu0 0.0
    %576 = vmatpush1.msra.mxu0 %v538
    %577 = vmatprep.subr.mxu0 0.0
    %578 = vmatpush2.msra.mxu0 0.0
    %579 = vmatprep.subr.mxu0 0.0
    %580 = vmatpush2.msra.mxu0 0.0
    %581 = vmatprep.subr.mxu0 0.0
    %582 = vmatpush2.msra.mxu0 0.0
    %583 = vmatprep.subr.mxu0 0.0
    %584 = vmatpush2.msra.mxu0 0.0
    %585 = vmatprep.subr.mxu0 0.0
    %586 = vmatpush2.msra.mxu0 0.0
    %587 = vmatprep.subr.mxu0 0.0
    %588 = vmatpush2.msra.mxu0 0.0
    %589 = vmatprep.subr.mxu0 0.0
    %590 = vmatpush2.msra.mxu0 0.0
    %591 = vmatprep.subr.mxu0 0.0
    %592 = vmatpush2.msra.mxu0 0.0
    %593 = vmatprep.subr.mxu0 0.0
    %594 = vmatpush2.msra.mxu0 0.0
    %595 = vmatprep.subr.mxu0 0.0
    %596 = vmatpush2.msra.mxu0 0.0
    %597 = vmatprep.subr.mxu0 0.0
    %598 = vmatpush2.msra.mxu0 0.0
    %599 = vmatprep.subr.mxu0 0.0
    %600 = vmatpush2.msra.mxu0 0.0
    %601 = vmatprep.subr.mxu0 0.0
    %602 = vmatpush2.msra.mxu0 0.0
    %603 = vmatprep.subr.mxu0 0.0
    %604 = vmatpush2.msra.mxu0 0.0
    %605 = vmatprep.subr.mxu0 0.0
    %606 = vmatpush2.msra.mxu0 0.0
    %607 = vmatprep.subr.mxu0 0.0
    %608 = vmatpush2.msra.mxu0 0.0
    %609 = vmatprep.mubr.f32.mxu0 0.0
    %610 = vmatmul.mubr.f32.gmra.mxu0 %v543
    %v611 = vpop.f32.mrf.mxu0
    %v612 = vadd.f32 0.0, %v611
    %v613 = vpop.f32.mrf.mxu0
    %614 = vdwg.mxu0
    %v615 = vtanh.pop %v612
    %v616 = vld [vmem:[#allocation11] sm:$0x3f]
    %vm617 = vcmask 48128
    %v619 = vsel %vm617, %v615, 0
    %vm621 = vcmask 1045504
    %v623 = vsel %vm621, %v616, 0
    %625 = vmatprep.subr.mxu0 0.0
    %626 = vmatpush1.msra.mxu0 0.0
    %627 = vmatprep.subr.mxu0 0.0
    %628 = vmatpush1.msra.mxu0 0.0
    %629 = vmatprep.subr.mxu0 0.0
    %630 = vmatpush1.msra.mxu0 0.0
    %631 = vmatprep.subr.mxu0 0.0
    %632 = vmatpush1.msra.mxu0 0.0
    %633 = vmatprep.subr.mxu0 0.0
    %634 = vmatpush1.msra.mxu0 0.0
    %635 = vmatprep.subr.mxu0 0.0
    %636 = vmatpush1.msra.mxu0 0.0
    %637 = vmatprep.subr.mxu0 0.0
    %638 = vmatpush1.msra.mxu0 0.0
    %639 = vmatprep.subr.mxu0 0.0
    %640 = vmatpush1.msra.mxu0 0.0
    %641 = vmatprep.subr.mxu0 0.0
    %642 = vmatpush1.msra.mxu0 0.0
    %643 = vmatprep.subr.mxu0 0.0
    %644 = vmatpush1.msra.mxu0 0.0
    %645 = vmatprep.subr.mxu0 0.0
    %646 = vmatpush1.msra.mxu0 0.0
    %647 = vmatprep.subr.mxu0 0.0
    %648 = vmatpush1.msra.mxu0 0.0
    %649 = vmatprep.subr.mxu0 0.0
    %650 = vmatpush1.msra.mxu0 0.0
    %651 = vmatprep.subr.mxu0 0.0
    %652 = vmatpush1.msra.mxu0 0.0
    %653 = vmatprep.subr.mxu0 0.0
    %654 = vmatpush1.msra.mxu0 0.0
    %655 = vmatprep.subr.mxu0 0.0
    %656 = vmatpush1.msra.mxu0 %v623
    %657 = vmatprep.subr.mxu0 0.0
    %658 = vmatpush2.msra.mxu0 0.0
    %659 = vmatprep.subr.mxu0 0.0
    %660 = vmatpush2.msra.mxu0 0.0
    %661 = vmatprep.subr.mxu0 0.0
    %662 = vmatpush2.msra.mxu0 0.0
    %663 = vmatprep.subr.mxu0 0.0
    %664 = vmatpush2.msra.mxu0 0.0
    %665 = vmatprep.subr.mxu0 0.0
    %666 = vmatpush2.msra.mxu0 0.0
    %667 = vmatprep.subr.mxu0 0.0
    %668 = vmatpush2.msra.mxu0 0.0
    %669 = vmatprep.subr.mxu0 0.0
    %670 = vmatpush2.msra.mxu0 0.0
    %671 = vmatprep.subr.mxu0 0.0
    %672 = vmatpush2.msra.mxu0 0.0
    %673 = vmatprep.subr.mxu0 0.0
    %674 = vmatpush2.msra.mxu0 0.0
    %675 = vmatprep.subr.mxu0 0.0
    %676 = vmatpush2.msra.mxu0 0.0
    %677 = vmatprep.subr.mxu0 0.0
    %678 = vmatpush2.msra.mxu0 0.0
    %679 = vmatprep.subr.mxu0 0.0
    %680 = vmatpush2.msra.mxu0 0.0
    %681 = vmatprep.subr.mxu0 0.0
    %682 = vmatpush2.msra.mxu0 0.0
    %683 = vmatprep.subr.mxu0 0.0
    %684 = vmatpush2.msra.mxu0 0.0
    %685 = vmatprep.subr.mxu0 0.0
    %686 = vmatpush2.msra.mxu0 0.0
    %687 = vmatprep.subr.mxu0 0.0
    %688 = vmatpush2.msra.mxu0 0.0
    %689 = vmatprep.mubr.f32.mxu0 0.0
    %690 = vmatmul.mubr.f32.gmra.mxu0 %v619
    %v691 = vpop.f32.mrf.mxu0
    %v692 = vadd.f32 0.0, %v691
    %v693 = vpop.f32.mrf.mxu0
    %694 = vdwg.mxu0
    %v695 = vmul.f32 %v692, %v187
    %v696 = vadd.f32 %v695, %v171
    %697 = vst.msk [vmem:[%s18] sm:$0xff] %vm167, %v696
    %vm698 = vcmask 72768
    %699 = vst.msk [vmem:[%s18] sm:$0xff] %vm698, %v190
    %vm700 = vcmask 80968
    %701 = vst.msk [vmem:[%s18] sm:$0xff] %vm700, %v193
    %v702 = vld [vmem:[%s11] sm:$0x3f]
    %v703 = vld [vmem:[%s12] sm:$0xf]
    %v704 = vlaneseq
    %v705 = vshrl.u32 %v704, 7
    %v706 = vsub.s32 0, %v705
    %v707 = vrot.slane %v703, %v706
    %v708 = vmul.f32 %v171, %v707
    %v710 = vsel %vm621, %v702, 0
    %712 = vmatprep.subr.mxu0 0.0
    %713 = vmatpush1.msra.mxu0 0.0
    %714 = vmatprep.subr.mxu0 0.0
    %715 = vmatpush1.msra.mxu0 0.0
    %716 = vmatprep.subr.mxu0 0.0
    %717 = vmatpush1.msra.mxu0 0.0
    %718 = vmatprep.subr.mxu0 0.0
    %719 = vmatpush1.msra.mxu0 0.0
    %720 = vmatprep.subr.mxu0 0.0
    %721 = vmatpush1.msra.mxu0 0.0
    %722 = vmatprep.subr.mxu0 0.0
    %723 = vmatpush1.msra.mxu0 0.0
    %724 = vmatprep.subr.mxu0 0.0
    %725 = vmatpush1.msra.mxu0 0.0
    %726 = vmatprep.subr.mxu0 0.0
    %727 = vmatpush1.msra.mxu0 0.0
    %728 = vmatprep.subr.mxu0 0.0
    %729 = vmatpush1.msra.mxu0 0.0
    %730 = vmatprep.subr.mxu0 0.0
    %731 = vmatpush1.msra.mxu0 0.0
    %732 = vmatprep.subr.mxu0 0.0
    %733 = vmatpush1.msra.mxu0 0.0
    %734 = vmatprep.subr.mxu0 0.0
    %735 = vmatpush1.msra.mxu0 0.0
    %736 = vmatprep.subr.mxu0 0.0
    %737 = vmatpush1.msra.mxu0 0.0
    %738 = vmatprep.subr.mxu0 0.0
    %739 = vmatpush1.msra.mxu0 0.0
    %740 = vmatprep.subr.mxu0 0.0
    %741 = vmatpush1.msra.mxu0 0.0
    %742 = vmatprep.subr.mxu0 0.0
    %743 = vmatpush1.msra.mxu0 %v710
    %744 = vmatprep.subr.mxu0 0.0
    %745 = vmatpush2.msra.mxu0 0.0
    %746 = vmatprep.subr.mxu0 0.0
    %747 = vmatpush2.msra.mxu0 0.0
    %748 = vmatprep.subr.mxu0 0.0
    %749 = vmatpush2.msra.mxu0 0.0
    %750 = vmatprep.subr.mxu0 0.0
    %751 = vmatpush2.msra.mxu0 0.0
    %752 = vmatprep.subr.mxu0 0.0
    %753 = vmatpush2.msra.mxu0 0.0
    %754 = vmatprep.subr.mxu0 0.0
    %755 = vmatpush2.msra.mxu0 0.0
    %756 = vmatprep.subr.mxu0 0.0
    %757 = vmatpush2.msra.mxu0 0.0
    %758 = vmatprep.subr.mxu0 0.0
    %759 = vmatpush2.msra.mxu0 0.0
    %760 = vmatprep.subr.mxu0 0.0
    %761 = vmatpush2.msra.mxu0 0.0
    %762 = vmatprep.subr.mxu0 0.0
    %763 = vmatpush2.msra.mxu0 0.0
    %764 = vmatprep.subr.mxu0 0.0
    %765 = vmatpush2.msra.mxu0 0.0
    %766 = vmatprep.subr.mxu0 0.0
    %767 = vmatpush2.msra.mxu0 0.0
    %768 = vmatprep.subr.mxu0 0.0
    %769 = vmatpush2.msra.mxu0 0.0
    %770 = vmatprep.subr.mxu0 0.0
    %771 = vmatpush2.msra.mxu0 0.0
    %772 = vmatprep.subr.mxu0 0.0
    %773 = vmatpush2.msra.mxu0 0.0
    %774 = vmatprep.subr.mxu0 0.0
    %775 = vmatpush2.msra.mxu0 0.0
    %776 = vmatprep.mubr.f32.mxu0 0.0
    %777 = vmatmul.mubr.f32.gmra.mxu0 %v619
    %v778 = vpop.f32.mrf.mxu0
    %v779 = vadd.f32 %v708, %v778
    %v780 = vpop.f32.mrf.mxu0
    %781 = vdwg.mxu0
    %v782 = vlaneseq
    %v783 = vshrl.u32 %v782, 7
    %v784 = vsub.s32 1, %v783
    %v785 = vrot.slane %v703, %v784
    %v786 = vmul.f32 %v187, %v785
    %v787 = vadd.f32 %v779, %v786
    %v788 = vlaneseq
    %v789 = vshrl.u32 %v788, 7
    %v790 = vsub.s32 2, %v789
    %v791 = vrot.slane %v703, %v790
    %v792 = vmul.f32 %v190, %v791
    %v793 = vadd.f32 %v787, %v792
    %v794 = vlaneseq
    %v795 = vshrl.u32 %v794, 7
    %v796 = vsub.s32 3, %v795
    %v797 = vrot.slane %v703, %v796
    %v798 = vmul.f32 %v193, %v797
    %v799 = vadd.f32 %v793, %v798
    %s800 = scalar_lea.vmem %s11, 8
    %v801 = vld [vmem:[%s800] sm:$0x3f]
    %v802 = vrot.slane %v615, 2
    %v803 = vsel %vm617, %v802, 0
    %v806 = vsel %vm621, %v801, 0
    %808 = vmatprep.subr.mxu0 0.0
    %809 = vmatpush1.msra.mxu0 0.0
    %810 = vmatprep.subr.mxu0 0.0
    %811 = vmatpush1.msra.mxu0 0.0
    %812 = vmatprep.subr.mxu0 0.0
    %813 = vmatpush1.msra.mxu0 0.0
    %814 = vmatprep.subr.mxu0 0.0
    %815 = vmatpush1.msra.mxu0 0.0
    %816 = vmatprep.subr.mxu0 0.0
    %817 = vmatpush1.msra.mxu0 0.0
    %818 = vmatprep.subr.mxu0 0.0
    %819 = vmatpush1.msra.mxu0 0.0
    %820 = vmatprep.subr.mxu0 0.0
    %821 = vmatpush1.msra.mxu0 0.0
    %822 = vmatprep.subr.mxu0 0.0
    %823 = vmatpush1.msra.mxu0 0.0
    %824 = vmatprep.subr.mxu0 0.0
    %825 = vmatpush1.msra.mxu0 0.0
    %826 = vmatprep.subr.mxu0 0.0
    %827 = vmatpush1.msra.mxu0 0.0
    %828 = vmatprep.subr.mxu0 0.0
    %829 = vmatpush1.msra.mxu0 0.0
    %830 = vmatprep.subr.mxu0 0.0
    %831 = vmatpush1.msra.mxu0 0.0
    %832 = vmatprep.subr.mxu0 0.0
    %833 = vmatpush1.msra.mxu0 0.0
    %834 = vmatprep.subr.mxu0 0.0
    %835 = vmatpush1.msra.mxu0 0.0
    %836 = vmatprep.subr.mxu0 0.0
    %837 = vmatpush1.msra.mxu0 0.0
    %838 = vmatprep.subr.mxu0 0.0
    %839 = vmatpush1.msra.mxu0 %v806
    %840 = vmatprep.subr.mxu0 0.0
    %841 = vmatpush2.msra.mxu0 0.0
    %842 = vmatprep.subr.mxu0 0.0
    %843 = vmatpush2.msra.mxu0 0.0
    %844 = vmatprep.subr.mxu0 0.0
    %845 = vmatpush2.msra.mxu0 0.0
    %846 = vmatprep.subr.mxu0 0.0
    %847 = vmatpush2.msra.mxu0 0.0
    %848 = vmatprep.subr.mxu0 0.0
    %849 = vmatpush2.msra.mxu0 0.0
    %850 = vmatprep.subr.mxu0 0.0
    %851 = vmatpush2.msra.mxu0 0.0
    %852 = vmatprep.subr.mxu0 0.0
    %853 = vmatpush2.msra.mxu0 0.0
    %854 = vmatprep.subr.mxu0 0.0
    %855 = vmatpush2.msra.mxu0 0.0
    %856 = vmatprep.subr.mxu0 0.0
    %857 = vmatpush2.msra.mxu0 0.0
    %858 = vmatprep.subr.mxu0 0.0
    %859 = vmatpush2.msra.mxu0 0.0
    %860 = vmatprep.subr.mxu0 0.0
    %861 = vmatpush2.msra.mxu0 0.0
    %862 = vmatprep.subr.mxu0 0.0
    %863 = vmatpush2.msra.mxu0 0.0
    %864 = vmatprep.subr.mxu0 0.0
    %865 = vmatpush2.msra.mxu0 0.0
    %866 = vmatprep.subr.mxu0 0.0
    %867 = vmatpush2.msra.mxu0 0.0
    %868 = vmatprep.subr.mxu0 0.0
    %869 = vmatpush2.msra.mxu0 0.0
    %870 = vmatprep.subr.mxu0 0.0
    %871 = vmatpush2.msra.mxu0 0.0
    %872 = vmatprep.mubr.f32.mxu0 0.0
    %873 = vmatmul.mubr.f32.gmra.mxu0 %v803
    %v874 = vpop.f32.mrf.mxu0
    %v875 = vadd.f32 0.0, %v874
    %v876 = vpop.f32.mrf.mxu0
    %877 = vdwg.mxu0
    %v878 = vadd.f32 %v799, %v875
    %s879 = scalar_lea.vmem %s12, 4
    %v880 = vld [vmem:[%s879] sm:$0xf]
    %v881 = vlaneseq
    %v882 = vshrl.u32 %v881, 7
    %v883 = vsub.s32 0, %v882
    %v884 = vrot.slane %v880, %v883
    %v885 = vmul.f32 %v171, %v884
    %v887 = vrot.slane %v885, 2
    %v889 = vadd.f32 %v878, %v887
    %v890 = vlaneseq
    %v891 = vshrl.u32 %v890, 7
    %v892 = vsub.s32 1, %v891
    %v893 = vrot.slane %v880, %v892
    %v894 = vmul.f32 %v187, %v893
    %v896 = vrot.slane %v894, 2
    %v898 = vadd.f32 %v889, %v896
    %v899 = vlaneseq
    %v900 = vshrl.u32 %v899, 7
    %v901 = vsub.s32 2, %v900
    %v902 = vrot.slane %v880, %v901
    %v903 = vmul.f32 %v190, %v902
    %v905 = vrot.slane %v903, 2
    %v907 = vadd.f32 %v898, %v905
    %v908 = vlaneseq
    %v909 = vshrl.u32 %v908, 7
    %v910 = vsub.s32 3, %v909
    %v911 = vrot.slane %v880, %v910
    %v912 = vmul.f32 %v193, %v911
    %v914 = vrot.slane %v912, 2
    %v916 = vadd.f32 %v907, %v914
    %s917 = scalar_lea.vmem %s11, 16
    %v918 = vld [vmem:[%s917] sm:$0x3f]
    %v919 = vrot.slane %v615, 4
    %v920 = vsel %vm617, %v919, 0
    %v923 = vsel %vm621, %v918, 0
    %925 = vmatprep.subr.mxu0 0.0
    %926 = vmatpush1.msra.mxu0 0.0
    %927 = vmatprep.subr.mxu0 0.0
    %928 = vmatpush1.msra.mxu0 0.0
    %929 = vmatprep.subr.mxu0 0.0
    %930 = vmatpush1.msra.mxu0 0.0
    %931 = vmatprep.subr.mxu0 0.0
    %932 = vmatpush1.msra.mxu0 0.0
    %933 = vmatprep.subr.mxu0 0.0
    %934 = vmatpush1.msra.mxu0 0.0
    %935 = vmatprep.subr.mxu0 0.0
    %936 = vmatpush1.msra.mxu0 0.0
    %937 = vmatprep.subr.mxu0 0.0
    %938 = vmatpush1.msra.mxu0 0.0
    %939 = vmatprep.subr.mxu0 0.0
    %940 = vmatpush1.msra.mxu0 0.0
    %941 = vmatprep.subr.mxu0 0.0
    %942 = vmatpush1.msra.mxu0 0.0
    %943 = vmatprep.subr.mxu0 0.0
    %944 = vmatpush1.msra.mxu0 0.0
    %945 = vmatprep.subr.mxu0 0.0
    %946 = vmatpush1.msra.mxu0 0.0
    %947 = vmatprep.subr.mxu0 0.0
    %948 = vmatpush1.msra.mxu0 0.0
    %949 = vmatprep.subr.mxu0 0.0
    %950 = vmatpush1.msra.mxu0 0.0
    %951 = vmatprep.subr.mxu0 0.0
    %952 = vmatpush1.msra.mxu0 0.0
    %953 = vmatprep.subr.mxu0 0.0
    %954 = vmatpush1.msra.mxu0 0.0
    %955 = vmatprep.subr.mxu0 0.0
    %956 = vmatpush1.msra.mxu0 %v923
    %957 = vmatprep.subr.mxu0 0.0
    %958 = vmatpush2.msra.mxu0 0.0
    %959 = vmatprep.subr.mxu0 0.0
    %960 = vmatpush2.msra.mxu0 0.0
    %961 = vmatprep.subr.mxu0 0.0
    %962 = vmatpush2.msra.mxu0 0.0
    %963 = vmatprep.subr.mxu0 0.0
    %964 = vmatpush2.msra.mxu0 0.0
    %965 = vmatprep.subr.mxu0 0.0
    %966 = vmatpush2.msra.mxu0 0.0
    %967 = vmatprep.subr.mxu0 0.0
    %968 = vmatpush2.msra.mxu0 0.0
    %969 = vmatprep.subr.mxu0 0.0
    %970 = vmatpush2.msra.mxu0 0.0
    %971 = vmatprep.subr.mxu0 0.0
    %972 = vmatpush2.msra.mxu0 0.0
    %973 = vmatprep.subr.mxu0 0.0
    %974 = vmatpush2.msra.mxu0 0.0
    %975 = vmatprep.subr.mxu0 0.0
    %976 = vmatpush2.msra.mxu0 0.0
    %977 = vmatprep.subr.mxu0 0.0
    %978 = vmatpush2.msra.mxu0 0.0
    %979 = vmatprep.subr.mxu0 0.0
    %980 = vmatpush2.msra.mxu0 0.0
    %981 = vmatprep.subr.mxu0 0.0
    %982 = vmatpush2.msra.mxu0 0.0
    %983 = vmatprep.subr.mxu0 0.0
    %984 = vmatpush2.msra.mxu0 0.0
    %985 = vmatprep.subr.mxu0 0.0
    %986 = vmatpush2.msra.mxu0 0.0
    %987 = vmatprep.subr.mxu0 0.0
    %988 = vmatpush2.msra.mxu0 0.0
    %989 = vmatprep.mubr.f32.mxu0 0.0
    %990 = vmatmul.mubr.f32.gmra.mxu0 %v920
    %v991 = vpop.f32.mrf.mxu0
    %v992 = vadd.f32 0.0, %v991
    %v993 = vpop.f32.mrf.mxu0
    %994 = vdwg.mxu0
    %v995 = vadd.f32 %v916, %v992
    %s996 = scalar_lea.vmem %s12, 8
    %v997 = vld [vmem:[%s996] sm:$0xf]
    %v998 = vlaneseq
    %v999 = vshrl.u32 %v998, 7
    %v1000 = vsub.s32 0, %v999
    %v1001 = vrot.slane %v997, %v1000
    %v1002 = vmul.f32 %v171, %v1001
    %v1004 = vrot.slane %v1002, 4
    %v1006 = vadd.f32 %v995, %v1004
    %v1007 = vlaneseq
    %v1008 = vshrl.u32 %v1007, 7
    %v1009 = vsub.s32 1, %v1008
    %v1010 = vrot.slane %v997, %v1009
    %v1011 = vmul.f32 %v187, %v1010
    %v1013 = vrot.slane %v1011, 4
    %v1015 = vadd.f32 %v1006, %v1013
    %v1016 = vlaneseq
    %v1017 = vshrl.u32 %v1016, 7
    %v1018 = vsub.s32 2, %v1017
    %v1019 = vrot.slane %v997, %v1018
    %v1020 = vmul.f32 %v190, %v1019
    %v1022 = vrot.slane %v1020, 4
    %v1024 = vadd.f32 %v1015, %v1022
    %v1025 = vlaneseq
    %v1026 = vshrl.u32 %v1025, 7
    %v1027 = vsub.s32 3, %v1026
    %v1028 = vrot.slane %v997, %v1027
    %v1029 = vmul.f32 %v193, %v1028
    %v1031 = vrot.slane %v1029, 4
    %v1033 = vadd.f32 %v1024, %v1031
    %s1034 = scalar_lea.vmem %s11, 24
    %v1035 = vld [vmem:[%s1034] sm:$0x3f]
    %v1036 = vrot.slane %v615, 6
    %v1037 = vsel %vm617, %v1036, 0
    %v1040 = vsel %vm621, %v1035, 0
    %1042 = vmatprep.subr.mxu0 0.0
    %1043 = vmatpush1.msra.mxu0 0.0
    %1044 = vmatprep.subr.mxu0 0.0
    %1045 = vmatpush1.msra.mxu0 0.0
    %1046 = vmatprep.subr.mxu0 0.0
    %1047 = vmatpush1.msra.mxu0 0.0
    %1048 = vmatprep.subr.mxu0 0.0
    %1049 = vmatpush1.msra.mxu0 0.0
    %1050 = vmatprep.subr.mxu0 0.0
    %1051 = vmatpush1.msra.mxu0 0.0
    %1052 = vmatprep.subr.mxu0 0.0
    %1053 = vmatpush1.msra.mxu0 0.0
    %1054 = vmatprep.subr.mxu0 0.0
    %1055 = vmatpush1.msra.mxu0 0.0
    %1056 = vmatprep.subr.mxu0 0.0
    %1057 = vmatpush1.msra.mxu0 0.0
    %1058 = vmatprep.subr.mxu0 0.0
    %1059 = vmatpush1.msra.mxu0 0.0
    %1060 = vmatprep.subr.mxu0 0.0
    %1061 = vmatpush1.msra.mxu0 0.0
    %1062 = vmatprep.subr.mxu0 0.0
    %1063 = vmatpush1.msra.mxu0 0.0
    %1064 = vmatprep.subr.mxu0 0.0
    %1065 = vmatpush1.msra.mxu0 0.0
    %1066 = vmatprep.subr.mxu0 0.0
    %1067 = vmatpush1.msra.mxu0 0.0
    %1068 = vmatprep.subr.mxu0 0.0
    %1069 = vmatpush1.msra.mxu0 0.0
    %1070 = vmatprep.subr.mxu0 0.0
    %1071 = vmatpush1.msra.mxu0 0.0
    %1072 = vmatprep.subr.mxu0 0.0
    %1073 = vmatpush1.msra.mxu0 %v1040
    %1074 = vmatprep.subr.mxu0 0.0
    %1075 = vmatpush2.msra.mxu0 0.0
    %1076 = vmatprep.subr.mxu0 0.0
    %1077 = vmatpush2.msra.mxu0 0.0
    %1078 = vmatprep.subr.mxu0 0.0
    %1079 = vmatpush2.msra.mxu0 0.0
    %1080 = vmatprep.subr.mxu0 0.0
    %1081 = vmatpush2.msra.mxu0 0.0
    %1082 = vmatprep.subr.mxu0 0.0
    %1083 = vmatpush2.msra.mxu0 0.0
    %1084 = vmatprep.subr.mxu0 0.0
    %1085 = vmatpush2.msra.mxu0 0.0
    %1086 = vmatprep.subr.mxu0 0.0
    %1087 = vmatpush2.msra.mxu0 0.0
    %1088 = vmatprep.subr.mxu0 0.0
    %1089 = vmatpush2.msra.mxu0 0.0
    %1090 = vmatprep.subr.mxu0 0.0
    %1091 = vmatpush2.msra.mxu0 0.0
    %1092 = vmatprep.subr.mxu0 0.0
    %1093 = vmatpush2.msra.mxu0 0.0
    %1094 = vmatprep.subr.mxu0 0.0
    %1095 = vmatpush2.msra.mxu0 0.0
    %1096 = vmatprep.subr.mxu0 0.0
    %1097 = vmatpush2.msra.mxu0 0.0
    %1098 = vmatprep.subr.mxu0 0.0
    %1099 = vmatpush2.msra.mxu0 0.0
    %1100 = vmatprep.subr.mxu0 0.0
    %1101 = vmatpush2.msra.mxu0 0.0
    %1102 = vmatprep.subr.mxu0 0.0
    %1103 = vmatpush2.msra.mxu0 0.0
    %1104 = vmatprep.subr.mxu0 0.0
    %1105 = vmatpush2.msra.mxu0 0.0
    %1106 = vmatprep.mubr.f32.mxu0 0.0
    %1107 = vmatmul.mubr.f32.gmra.mxu0 %v1037
    %v1108 = vpop.f32.mrf.mxu0
    %v1109 = vadd.f32 0.0, %v1108
    %v1110 = vpop.f32.mrf.mxu0
    %1111 = vdwg.mxu0
    %v1112 = vadd.f32 %v1033, %v1109
    %s1113 = scalar_lea.vmem %s12, 12
    %v1114 = vld [vmem:[%s1113] sm:$0xf]
    %v1115 = vlaneseq
    %v1116 = vshrl.u32 %v1115, 7
    %v1117 = vsub.s32 0, %v1116
    %v1118 = vrot.slane %v1114, %v1117
    %v1119 = vmul.f32 %v171, %v1118
    %v1121 = vrot.slane %v1119, 6
    %v1123 = vadd.f32 %v1112, %v1121
    %v1124 = vlaneseq
    %v1125 = vshrl.u32 %v1124, 7
    %v1126 = vsub.s32 1, %v1125
    %v1127 = vrot.slane %v1114, %v1126
    %v1128 = vmul.f32 %v187, %v1127
    %v1130 = vrot.slane %v1128, 6
    %v1132 = vadd.f32 %v1123, %v1130
    %v1133 = vlaneseq
    %v1134 = vshrl.u32 %v1133, 7
    %v1135 = vsub.s32 2, %v1134
    %v1136 = vrot.slane %v1114, %v1135
    %v1137 = vmul.f32 %v190, %v1136
    %v1139 = vrot.slane %v1137, 6
    %v1141 = vadd.f32 %v1132, %v1139
    %v1142 = vlaneseq
    %v1143 = vshrl.u32 %v1142, 7
    %v1144 = vsub.s32 3, %v1143
    %v1145 = vrot.slane %v1114, %v1144
    %v1146 = vmul.f32 %v193, %v1145
    %v1148 = vrot.slane %v1146, 6
    %v1150 = vadd.f32 %v1141, %v1148
    %v1151 = vld [vmem:[#allocation13] sm:$0x1]
    %v1153 = vlaneseq
    %v1154 = vshrl.u32 %v1153, 7
    %v1155 = vsub.s32 0, %v1154
    %v1156 = vrot.slane %v1151, %v1155
    %v1158 = vadd.f32 %v1150, %v1156
    %v1159 = vmax.f32 %v1158, 0.0
    %v1160 = vld [vmem:[%s14] sm:$0xff]
    %v1161 = vld [vmem:[%s14 + $0x8] sm:$0xff]
    %v1162 = vld [vmem:[%s14 + $0x10] sm:$0xff]
    %v1163 = vld [vmem:[%s14 + $0x18] sm:$0xff]
    %v1164 = vld [vmem:[#allocation14] sm:$0x1]
    %v1166 = vlaneseq
    %v1167 = vshrl.u32 %v1166, 7
    %v1168 = vsub.s32 0, %v1167
    %v1169 = vrot.slane %v1164, %v1168
    %v1172 = vsel %vm293, %v1159, 0
    %1174 = vmatprep.subr.mxu0 0.0
    %1175 = vmatpush1.msra.mxu0 0.0
    %1176 = vmatprep.subr.mxu0 0.0
    %1177 = vmatpush1.msra.mxu0 0.0
    %1178 = vmatprep.subr.mxu0 0.0
    %1179 = vmatpush1.msra.mxu0 0.0
    %1180 = vmatprep.subr.mxu0 0.0
    %1181 = vmatpush1.msra.mxu0 0.0
    %1182 = vmatprep.subr.mxu0 0.0
    %1183 = vmatpush1.msra.mxu0 0.0
    %1184 = vmatprep.subr.mxu0 0.0
    %1185 = vmatpush1.msra.mxu0 0.0
    %1186 = vmatprep.subr.mxu0 0.0
    %1187 = vmatpush1.msra.mxu0 0.0
    %1188 = vmatprep.subr.mxu0 0.0
    %1189 = vmatpush1.msra.mxu0 0.0
    %1190 = vmatprep.subr.mxu0 0.0
    %1191 = vmatpush1.msra.mxu0 0.0
    %1192 = vmatprep.subr.mxu0 0.0
    %1193 = vmatpush1.msra.mxu0 0.0
    %1194 = vmatprep.subr.mxu0 0.0
    %1195 = vmatpush1.msra.mxu0 0.0
    %1196 = vmatprep.subr.mxu0 0.0
    %1197 = vmatpush1.msra.mxu0 0.0
    %1198 = vmatprep.subr.mxu0 0.0
    %1199 = vmatpush1.msra.mxu0 %v1163
    %1200 = vmatprep.subr.mxu0 0.0
    %1201 = vmatpush1.msra.mxu0 %v1162
    %1202 = vmatprep.subr.mxu0 0.0
    %1203 = vmatpush1.msra.mxu0 %v1161
    %1204 = vmatprep.subr.mxu0 0.0
    %1205 = vmatpush1.msra.mxu0 %v1160
    %1206 = vmatprep.subr.mxu0 0.0
    %1207 = vmatpush2.msra.mxu0 0.0
    %1208 = vmatprep.subr.mxu0 0.0
    %1209 = vmatpush2.msra.mxu0 0.0
    %1210 = vmatprep.subr.mxu0 0.0
    %1211 = vmatpush2.msra.mxu0 0.0
    %1212 = vmatprep.subr.mxu0 0.0
    %1213 = vmatpush2.msra.mxu0 0.0
    %1214 = vmatprep.subr.mxu0 0.0
    %1215 = vmatpush2.msra.mxu0 0.0
    %1216 = vmatprep.subr.mxu0 0.0
    %1217 = vmatpush2.msra.mxu0 0.0
    %1218 = vmatprep.subr.mxu0 0.0
    %1219 = vmatpush2.msra.mxu0 0.0
    %1220 = vmatprep.subr.mxu0 0.0
    %1221 = vmatpush2.msra.mxu0 0.0
    %1222 = vmatprep.subr.mxu0 0.0
    %1223 = vmatpush2.msra.mxu0 0.0
    %1224 = vmatprep.subr.mxu0 0.0
    %1225 = vmatpush2.msra.mxu0 0.0
    %1226 = vmatprep.subr.mxu0 0.0
    %1227 = vmatpush2.msra.mxu0 0.0
    %1228 = vmatprep.subr.mxu0 0.0
    %1229 = vmatpush2.msra.mxu0 0.0
    %1230 = vmatprep.subr.mxu0 0.0
    %1231 = vmatpush2.msra.mxu0 0.0
    %1232 = vmatprep.subr.mxu0 0.0
    %1233 = vmatpush2.msra.mxu0 0.0
    %1234 = vmatprep.subr.mxu0 0.0
    %1235 = vmatpush2.msra.mxu0 0.0
    %1236 = vmatprep.subr.mxu0 0.0
    %1237 = vmatpush2.msra.mxu0 0.0
    %1238 = vmatprep.mubr.f32.mxu0 0.0
    %1239 = vmatmul.mubr.f32.gmra.mxu0 %v1172
    %v1240 = vpop.f32.mrf.mxu0
    %v1241 = vadd.f32 %v1169, %v1240
    %v1242 = vpop.f32.mrf.mxu0
    %1243 = vdwg.mxu0
    %v1244 = vmax.f32 %v1241, 0.0
    %v1245 = vld [vmem:[%s16] sm:$0xff]
    %v1246 = vld [vmem:[%s16 + $0x8] sm:$0xff]
    %v1247 = vld [vmem:[%s16 + $0x10] sm:$0xff]
    %v1248 = vld [vmem:[%s16 + $0x18] sm:$0xff]
    %v1249 = vld [vmem:[#allocation16] sm:$0x1]
    %v1251 = vlaneseq
    %v1252 = vshrl.u32 %v1251, 7
    %v1253 = vsub.s32 0, %v1252
    %v1254 = vrot.slane %v1249, %v1253
    %v1257 = vsel %vm293, %v1244, 0
    %1259 = vmatprep.subr.mxu0 0.0
    %1260 = vmatpush1.msra.mxu0 0.0
    %1261 = vmatprep.subr.mxu0 0.0
    %1262 = vmatpush1.msra.mxu0 0.0
    %1263 = vmatprep.subr.mxu0 0.0
    %1264 = vmatpush1.msra.mxu0 0.0
    %1265 = vmatprep.subr.mxu0 0.0
    %1266 = vmatpush1.msra.mxu0 0.0
    %1267 = vmatprep.subr.mxu0 0.0
    %1268 = vmatpush1.msra.mxu0 0.0
    %1269 = vmatprep.subr.mxu0 0.0
    %1270 = vmatpush1.msra.mxu0 0.0
    %1271 = vmatprep.subr.mxu0 0.0
    %1272 = vmatpush1.msra.mxu0 0.0
    %1273 = vmatprep.subr.mxu0 0.0
    %1274 = vmatpush1.msra.mxu0 0.0
    %1275 = vmatprep.subr.mxu0 0.0
    %1276 = vmatpush1.msra.mxu0 0.0
    %1277 = vmatprep.subr.mxu0 0.0
    %1278 = vmatpush1.msra.mxu0 0.0
    %1279 = vmatprep.subr.mxu0 0.0
    %1280 = vmatpush1.msra.mxu0 0.0
    %1281 = vmatprep.subr.mxu0 0.0
    %1282 = vmatpush1.msra.mxu0 0.0
    %1283 = vmatprep.subr.mxu0 0.0
    %1284 = vmatpush1.msra.mxu0 %v1248
    %1285 = vmatprep.subr.mxu0 0.0
    %1286 = vmatpush1.msra.mxu0 %v1247
    %1287 = vmatprep.subr.mxu0 0.0
    %1288 = vmatpush1.msra.mxu0 %v1246
    %1289 = vmatprep.subr.mxu0 0.0
    %1290 = vmatpush1.msra.mxu0 %v1245
    %1291 = vmatprep.subr.mxu0 0.0
    %1292 = vmatpush2.msra.mxu0 0.0
    %1293 = vmatprep.subr.mxu0 0.0
    %1294 = vmatpush2.msra.mxu0 0.0
    %1295 = vmatprep.subr.mxu0 0.0
    %1296 = vmatpush2.msra.mxu0 0.0
    %1297 = vmatprep.subr.mxu0 0.0
    %1298 = vmatpush2.msra.mxu0 0.0
    %1299 = vmatprep.subr.mxu0 0.0
    %1300 = vmatpush2.msra.mxu0 0.0
    %1301 = vmatprep.subr.mxu0 0.0
    %1302 = vmatpush2.msra.mxu0 0.0
    %1303 = vmatprep.subr.mxu0 0.0
    %1304 = vmatpush2.msra.mxu0 0.0
    %1305 = vmatprep.subr.mxu0 0.0
    %1306 = vmatpush2.msra.mxu0 0.0
    %1307 = vmatprep.subr.mxu0 0.0
    %1308 = vmatpush2.msra.mxu0 0.0
    %1309 = vmatprep.subr.mxu0 0.0
    %1310 = vmatpush2.msra.mxu0 0.0
    %1311 = vmatprep.subr.mxu0 0.0
    %1312 = vmatpush2.msra.mxu0 0.0
    %1313 = vmatprep.subr.mxu0 0.0
    %1314 = vmatpush2.msra.mxu0 0.0
    %1315 = vmatprep.subr.mxu0 0.0
    %1316 = vmatpush2.msra.mxu0 0.0
    %1317 = vmatprep.subr.mxu0 0.0
    %1318 = vmatpush2.msra.mxu0 0.0
    %1319 = vmatprep.subr.mxu0 0.0
    %1320 = vmatpush2.msra.mxu0 0.0
    %1321 = vmatprep.subr.mxu0 0.0
    %1322 = vmatpush2.msra.mxu0 0.0
    %1323 = vmatprep.mubr.f32.mxu0 0.0
    %1324 = vmatmul.mubr.f32.gmra.mxu0 %v1257
    %v1325 = vpop.f32.mrf.mxu0
    %v1326 = vadd.f32 %v1254, %v1325
    %v1327 = vpop.f32.mrf.mxu0
    %1328 = vdwg.mxu0
    %vm1329 = vcmask 17408
    %1330 = vst.msk [vmem:[#allocation17] sm:$0x3] %vm1329, %v1326
    // Predicated region
    $region110: #{base_block_forward.1} parent=1 // pred_check
      _
    $region111: #{base_block_forward.1} parent=1 // pred_check_branch
      %1332 = sbr.rel (0) target = $region113
    $region112: #{base_block_forward.1} parent=1 // pred_region
      _
    $region113: #{base_block_forward.1} parent=1 // pred_fallthru
      _
    // Predicated region
    $region114: #{base_block_forward.1} parent=1 // pred_check
      _
    $region115: #{base_block_forward.1} parent=1 // pred_check_branch
      %1334 = sbr.rel (0) target = $region117
    $region116: #{base_block_forward.1} parent=1 // pred_region
      %s1336 = ssub.s32 32, 32
      %1337 = vsyncadd [#allocation4], %s1336
      %s1339 = sshll.u32 [#allocation17], 4
      %s1340 = int_to_ptr.vmem [resolvable:$true] %s1339
      %1342 = dma.vmem_to_hbm [thread:$0]  %s1340, 32, %s19, [#allocation4]
    $region117: #{base_block_forward.1} parent=1 // pred_fallthru
      _
    // Predicated region
    $region118: #{base_block_forward.1} parent=1 // pred_check
      _
    $region119: #{base_block_forward.1} parent=1 // pred_check_branch
      %1344 = sbr.rel (0) target = $region121
    $region120: #{base_block_forward.1} parent=1 // pred_region
      _
    $region121: #{base_block_forward.1} parent=1 // pred_fallthru
      _
    // Predicated region
    $region122: #{base_block_forward.1} parent=1 // pred_check
      _
    $region123: #{base_block_forward.1} parent=1 // pred_check_branch
      %1346 = sbr.rel (0) target = $region125
    $region124: #{base_block_forward.1} parent=1 // pred_region
      %1347 = dma.done [#allocation4], 32
    $region125: #{base_block_forward.1} parent=1 // pred_fallthru
      _
    %1348 = vsyncpa [#allocation3], 1
    %1349 = vsyncpa [#allocation6], 1
    %1350 = vsyncpa [#allocation9], 1
    %1351 = vsyncpa [#allocation12], 1
    %1352 = vsyncpa [#allocation15], 1
    %1353 = vsyncpa [#allocation4], 1

</llo_original>
